<compile_context>
chip_gen: v7x
topology: tpu7x:2x2x1
jax: 0.10.0
libtpu: 0.0.40
codegen_flags: <defaults>
</compile_context>

<pallas_src>
import jax
import jax.numpy as jnp
from jax import lax
from jax.experimental import pallas as pl
from jax.experimental.pallas import tpu as pltpu  # noqa: F401  (kept for TPU-specific tuning)

# ----------------------------- small config ---------------------------------
B = 2              # batch
L = 8              # text sequence length (num tokens)
HB = 32            # BERT hidden size (synthetic)
D = 64             # transformer d_model (hidden_dim); must be divisible by 32
G = 32             # GroupNorm groups
CPG = D // G       # channels per group
CIN = 16           # backbone output channels
H = 16
W = 16
HW = H * W
NQ = 16            # num_queries
NL = 2             # num decoder layers
NLQ = NL * NQ      # folded (layer, query) rows per batch
MAXT = 256         # max_text_len (hardcoded in module)
TXT_SLAB = 128     # lane-aligned text slab actually matmul'ed (L <= 128)
BOX_W = 128        # lane-padded bbox output width (first 4 lanes are real coords)
GN_EPS = 1e-5
F32 = jnp.float32

assert MAXT == 2 * TXT_SLAB and L <= TXT_SLAB and B * NLQ * 4 <= BOX_W * B


# -------------------- single fused GroundingDINO kernel ----------------------
def _gdino_kernel(bert_ref, wf_ref, bf_ref, hs_ref, ref_ref,
                  w1_ref, b1_ref, w2_ref, b2_ref, w3_ref, b3_ref,
                  bias_ref, x_ref, wp_ref, bp_ref, g_ref, be_ref, p_ref,
                  cls_ref, box_ref, src_ref):
    # ---- bbox head: NL and B folded into M = B*NL*NQ = 64 (runs exactly once) ----
    hs_all = hs_ref[...]                                                     # (B*NL*NQ, D)
    h1 = jnp.maximum(
        jnp.dot(hs_all, w1_ref[...], preferred_element_type=F32) + b1_ref[...], 0.0)
    h2 = jnp.maximum(
        jnp.dot(h1, w2_ref[...], preferred_element_type=F32) + b2_ref[...], 0.0)
    delta = jnp.dot(h2, w3_ref[...], preferred_element_type=F32) + b3_ref[...]  # (M, BOX_W)

    # inverse_sigmoid(ref, eps=1e-3); padded lanes carry 0.5 -> inv == 0 (harmless)
    r = jnp.clip(ref_ref[...], 0.0, 1.0)
    inv = jnp.log(jnp.maximum(r, 1e-3) / jnp.maximum(1.0 - r, 1e-3))
    box_ref[...] = jax.nn.sigmoid(delta + inv)          # one unmasked 128-lane store slab

    # ---- hoisted loop invariants (loaded once) ----
    wf = wf_ref[...]                                    # (HB, D)
    bf = bf_ref[...]                                    # (1, D)
    wp = wp_ref[...]                                    # (D, CIN)
    bp = bp_ref[...]                                    # (D, 1)
    gamma = g_ref[...]                                  # (D, 1)
    beta = be_ref[...]                                  # (D, 1)
    padj = p_ref[...]                                   # (D, D) group adjacency
    n = jnp.float32(HW * CPG)

    def batch_body(b, carry):
        # --- feat_map (once per batch; padded text rows are masked by the -inf bias) ---
        enc_b = jnp.dot(bert_ref[b], wf, preferred_element_type=F32) + bf   # (TXT_SLAB, D)

        # --- class head (ContrastiveEmbed) against in-VMEM encoded text ---
        start = pl.multiple_of(b * NLQ, NLQ)
        hs_b = hs_ref[pl.ds(start, NLQ), :]                                 # (NL*NQ, D)
        logits = lax.dot_general(hs_b, enc_b, (((1,), (1,)), ((), ())),
                                 preferred_element_type=F32)                # (NL*NQ, TXT_SLAB)
        cls_ref[b] = logits + bias_ref[b]          # additive 0 / -inf mask, 128-lane store

        # --- input_proj: 1x1 conv + GroupNorm(32, D), channels-first ---
        xb = x_ref[b]                                                       # (CIN, HW)
        y = jnp.dot(wp, xb, preferred_element_type=F32) + bp                # (D, HW)
        s = jnp.sum(y, axis=1, keepdims=True)                               # (D, 1) lane reduce
        mean_c = jnp.dot(padj, s, preferred_element_type=F32) / n           # (D, 1) group mean
        yc = y - mean_c
        sq = jnp.sum(yc * yc, axis=1, keepdims=True)                        # (D, 1) lane reduce
        var_c = jnp.dot(padj, sq, preferred_element_type=F32) / n           # (D, 1) biased var
        src_ref[b] = (yc * lax.rsqrt(var_c + GN_EPS)) * gamma + beta        # 256-lane store
        return carry

    lax.fori_loop(0, B, batch_body, 0, unroll=True)


@jax.jit
def forward(bert_hidden, txt_bias, src_nchw, hs_stack, reference,
            w_feat, b_feat, w_proj, b_proj, gamma, beta,
            w1, b1, w2, b2, w3p, b3p):
    # Pad bert text to a lane-aligned 128-row slab; padded rows get finite (bias-only)
    # encodings whose logit columns are forced to -inf by the additive mask bias.
    bert_pad = jnp.concatenate(
        [bert_hidden, jnp.zeros((B, TXT_SLAB - L, HB), F32)], axis=1)        # (B, TXT_SLAB, HB)

    # Fold (NL, B, NQ) into batch-major rows: one M = B*NL*NQ pass for the bbox MLP.
    hs_flat = jnp.transpose(hs_stack, (1, 0, 2, 3)).reshape(B * NLQ, D)
    ref_flat = jnp.transpose(reference[:NL], (1, 0, 2, 3)).reshape(B * NLQ, 4)
    # pad reference lanes with 0.5 -> inverse_sigmoid = 0, result discarded by slice
    ref_pad = jnp.concatenate(
        [ref_flat, jnp.full((B * NLQ, BOX_W - 4), 0.5, F32)], axis=-1)       # (B*NL*NQ, 128)

    # NCHW -> (B, CIN, HW): free reshape, no transpose.
    x = src_nchw.reshape(B, CIN, HW)
    ch = jnp.arange(D) // CPG
    padj = (ch[:, None] == ch[None, :]).astype(F32)                          # (D, D)

    cls_out, box_out, src_out = pl.pallas_call(
        _gdino_kernel,
        out_shape=(
            jax.ShapeDtypeStruct((B, NLQ, TXT_SLAB), F32),
            jax.ShapeDtypeStruct((B * NLQ, BOX_W), F32),
            jax.ShapeDtypeStruct((B, D, HW), F32),
        ),
    )(bert_pad, w_feat, b_feat.reshape(1, D), hs_flat, ref_pad,
      w1, b1.reshape(1, D), w2, b2.reshape(1, D), w3p, b3p,
      txt_bias, x, w_proj, b_proj.reshape(D, 1),
      gamma.reshape(D, 1), beta.reshape(D, 1), padj)

    # Unfold + pad class logits to max_text_len in the wrapper (kernel stays lane-dense;
    # no constant -inf HBM writeback from the kernel).
    outputs_class = jnp.transpose(cls_out.reshape(B, NL, NQ, TXT_SLAB), (1, 0, 2, 3))
    outputs_class = jnp.concatenate(
        [outputs_class, jnp.full((NL, B, NQ, MAXT - TXT_SLAB), -jnp.inf, F32)], axis=-1)

    outputs_coord = jnp.transpose(box_out[:, :4].reshape(B, NL, NQ, 4), (1, 0, 2, 3))
    srcs0 = src_out.reshape(B, D, H, W)                                      # already NCHW

    out = {
        "pred_logits": outputs_class[-1],   # (B, NQ, max_text_len)
        "pred_boxes": outputs_coord[-1],    # (B, NQ, 4)
    }
    return out, srcs0


# ------------------------------- driver --------------------------------------
def main():
    key = jax.random.PRNGKey(0)
    keys = jax.random.split(key, 16)

    # ---- deterministic parameters (shapes per GroundingDINO.__init__) ----
    # feat_map: Linear(HB -> D), xavier_uniform weight, zero bias
    bound = (6.0 / (HB + D)) ** 0.5
    w_feat = jax.random.uniform(keys[0], (HB, D), F32, -bound, bound)
    b_feat = jnp.zeros((D,), F32)

    # input_proj[0]: Conv2d(CIN, D, 1) xavier_uniform (weight stored (out, in)), zero bias
    bound = (6.0 / (CIN + D)) ** 0.5
    w_proj = jax.random.uniform(keys[1], (D, CIN), F32, -bound, bound)
    b_proj = jnp.zeros((D,), F32)
    gamma = jnp.ones((D,), F32)
    beta = jnp.zeros((D,), F32)

    # bbox_embed: MLP(D, D, 4, 3); last layer weight/bias zero-init (shared across layers)
    w1 = jax.random.normal(keys[2], (D, D), F32) * 0.02
    b1 = jax.random.normal(keys[3], (D,), F32) * 0.02
    w2 = jax.random.normal(keys[4], (D, D), F32) * 0.02
    b2 = jax.random.normal(keys[5], (D,), F32) * 0.02
    w3 = jnp.zeros((D, 4), F32)
    b3 = jnp.zeros((4,), F32)
    # lane-padded last layer: columns 4..127 are zero (so padded output lanes are inert)
    w3p = jnp.concatenate([w3, jnp.zeros((D, BOX_W - 4), F32)], axis=1)      # (D, 128)
    b3p = jnp.concatenate([b3.reshape(1, 4), jnp.zeros((1, BOX_W - 4), F32)], axis=1)

    # ---- stubbed external-module outputs (backbone / BERT / transformer) ----
    bert_hidden = jax.random.normal(keys[6], (B, L, HB), F32)                # BERT last_hidden_state
    text_token_mask = jnp.array(
        [[True] * L, [True] * (L - 3) + [False] * 3], dtype=bool)            # (B, L)
    src_nchw = jax.random.normal(keys[7], (B, CIN, H, W), F32)               # backbone feature, NCHW
    hs_stack = jax.random.normal(keys[8], (NL, B, NQ, D), F32)               # decoder hidden states
    reference = jax.nn.sigmoid(
        jax.random.normal(keys[9], (NL + 1, B, NQ, 4), F32))                 # sigmoid ref points

    # additive text-mask bias: 0 for valid tokens, -inf for masked / text padding
    valid_bias = jnp.where(text_token_mask, 0.0, -jnp.inf).astype(F32)       # (B, L)
    txt_bias = jnp.concatenate(
        [valid_bias, jnp.full((B, TXT_SLAB - L), -jnp.inf, F32)], axis=1
    ).reshape(B, 1, TXT_SLAB)

    # ---- GroundingDINO-owned compute, in ONE Pallas kernel ----
    out, srcs0 = forward(bert_hidden, txt_bias, src_nchw, hs_stack, reference,
                         w_feat, b_feat, w_proj, b_proj, gamma, beta,
                         w1, b1, w2, b2, w3p, b3p)

    jax.block_until_ready(out["pred_logits"])
    jax.block_until_ready(out["pred_boxes"])
    jax.block_until_ready(srcs0)

    assert out["pred_logits"].shape == (B, NQ, MAXT)
    assert out["pred_boxes"].shape == (B, NQ, 4)
    assert srcs0.shape == (B, D, H, W)
    print("KERNEL_OK")


if __name__ == "__main__":
    main()
</pallas_src>

<mosaic_0001>
module attributes {stable_mosaic.version = 11 : i64} {
  func.func @_gdino_kernel(%arg0: memref<2x128x32xf32, #tpu.memory_space<vmem>>, %arg1: memref<32x64xf32, #tpu.memory_space<vmem>>, %arg2: memref<1x64xf32, #tpu.memory_space<vmem>>, %arg3: memref<64x64xf32, #tpu.memory_space<vmem>>, %arg4: memref<64x128xf32, #tpu.memory_space<vmem>>, %arg5: memref<64x64xf32, #tpu.memory_space<vmem>>, %arg6: memref<1x64xf32, #tpu.memory_space<vmem>>, %arg7: memref<64x64xf32, #tpu.memory_space<vmem>>, %arg8: memref<1x64xf32, #tpu.memory_space<vmem>>, %arg9: memref<64x128xf32, #tpu.memory_space<vmem>>, %arg10: memref<1x128xf32, #tpu.memory_space<vmem>>, %arg11: memref<2x1x128xf32, #tpu.memory_space<vmem>>, %arg12: memref<2x16x256xf32, #tpu.memory_space<vmem>>, %arg13: memref<64x16xf32, #tpu.memory_space<vmem>>, %arg14: memref<64x1xf32, #tpu.memory_space<vmem>>, %arg15: memref<64x1xf32, #tpu.memory_space<vmem>>, %arg16: memref<64x1xf32, #tpu.memory_space<vmem>>, %arg17: memref<64x64xf32, #tpu.memory_space<vmem>>, %arg18: memref<2x32x128xf32, #tpu.memory_space<vmem>>, %arg19: memref<64x128xf32, #tpu.memory_space<vmem>>, %arg20: memref<2x64x256xf32, #tpu.memory_space<vmem>>) attributes {dimension_semantics = [], scalar_prefetch = 0 : i64, scratch_operands = 0 : i64, tpu.core_type = #tpu.core_type<tc>} {
    %c0 = arith.constant 0 : index
    %c0_0 = arith.constant 0 : index
    %0 = vector.load %arg3[%c0, %c0_0] : memref<64x64xf32, #tpu.memory_space<vmem>>, vector<64x64xf32>
    %c0_1 = arith.constant 0 : index
    %c0_2 = arith.constant 0 : index
    %1 = vector.load %arg5[%c0_1, %c0_2] : memref<64x64xf32, #tpu.memory_space<vmem>>, vector<64x64xf32>
    %cst = arith.constant dense<0.000000e+00> : vector<64x64xf32>
    %2 = tpu.matmul %0, %1, %cst {dimension_numbers = #tpu.dot_dimension_numbers<[1], [0], [0], [1], [0, 0, 1, 1], [], []>} : vector<64x64xf32>, vector<64x64xf32>, vector<64x64xf32> -> vector<64x64xf32>
    %c0_3 = arith.constant 0 : index
    %c0_4 = arith.constant 0 : index
    %3 = vector.load %arg6[%c0_3, %c0_4] : memref<1x64xf32, #tpu.memory_space<vmem>>, vector<1x64xf32>
    %4 = vector.broadcast %3 : vector<1x64xf32> to vector<64x64xf32>
    %5 = arith.addf %2, %4 : vector<64x64xf32>
    %cst_5 = arith.constant 0.000000e+00 : f32
    %6 = vector.broadcast %cst_5 : f32 to vector<64x64xf32>
    %7 = arith.maximumf %5, %6 : vector<64x64xf32>
    %c0_6 = arith.constant 0 : index
    %c0_7 = arith.constant 0 : index
    %8 = vector.load %arg7[%c0_6, %c0_7] : memref<64x64xf32, #tpu.memory_space<vmem>>, vector<64x64xf32>
    %cst_8 = arith.constant dense<0.000000e+00> : vector<64x64xf32>
    %9 = tpu.matmul %7, %8, %cst_8 {dimension_numbers = #tpu.dot_dimension_numbers<[1], [0], [0], [1], [0, 0, 1, 1], [], []>} : vector<64x64xf32>, vector<64x64xf32>, vector<64x64xf32> -> vector<64x64xf32>
    %c0_9 = arith.constant 0 : index
    %c0_10 = arith.constant 0 : index
    %10 = vector.load %arg8[%c0_9, %c0_10] : memref<1x64xf32, #tpu.memory_space<vmem>>, vector<1x64xf32>
    %11 = vector.broadcast %10 : vector<1x64xf32> to vector<64x64xf32>
    %12 = arith.addf %9, %11 : vector<64x64xf32>
    %cst_11 = arith.constant 0.000000e+00 : f32
    %13 = vector.broadcast %cst_11 : f32 to vector<64x64xf32>
    %14 = arith.maximumf %12, %13 : vector<64x64xf32>
    %c0_12 = arith.constant 0 : index
    %c0_13 = arith.constant 0 : index
    %15 = vector.load %arg9[%c0_12, %c0_13] : memref<64x128xf32, #tpu.memory_space<vmem>>, vector<64x128xf32>
    %cst_14 = arith.constant dense<0.000000e+00> : vector<64x128xf32>
    %16 = tpu.matmul %14, %15, %cst_14 {dimension_numbers = #tpu.dot_dimension_numbers<[1], [0], [0], [1], [0, 0, 1, 1], [], []>} : vector<64x64xf32>, vector<64x128xf32>, vector<64x128xf32> -> vector<64x128xf32>
    %c0_15 = arith.constant 0 : index
    %c0_16 = arith.constant 0 : index
    %17 = vector.load %arg10[%c0_15, %c0_16] : memref<1x128xf32, #tpu.memory_space<vmem>>, vector<1x128xf32>
    %18 = vector.broadcast %17 : vector<1x128xf32> to vector<64x128xf32>
    %19 = arith.addf %16, %18 : vector<64x128xf32>
    %c0_17 = arith.constant 0 : index
    %c0_18 = arith.constant 0 : index
    %20 = vector.load %arg4[%c0_17, %c0_18] : memref<64x128xf32, #tpu.memory_space<vmem>>, vector<64x128xf32>
    %cst_19 = arith.constant 0.000000e+00 : f32
    %cst_20 = arith.constant 1.000000e+00 : f32
    %21 = vector.broadcast %cst_19 : f32 to vector<64x128xf32>
    %22 = arith.maximumf %21, %20 : vector<64x128xf32>
    %23 = vector.broadcast %cst_20 : f32 to vector<64x128xf32>
    %24 = arith.minimumf %23, %22 : vector<64x128xf32>
    %cst_21 = arith.constant 1.000000e-03 : f32
    %25 = vector.broadcast %cst_21 : f32 to vector<64x128xf32>
    %26 = arith.maximumf %24, %25 : vector<64x128xf32>
    %cst_22 = arith.constant 1.000000e+00 : f32
    %27 = vector.broadcast %cst_22 : f32 to vector<64x128xf32>
    %28 = arith.subf %27, %24 : vector<64x128xf32>
    %cst_23 = arith.constant 1.000000e-03 : f32
    %29 = vector.broadcast %cst_23 : f32 to vector<64x128xf32>
    %30 = arith.maximumf %28, %29 : vector<64x128xf32>
    %31 = arith.divf %26, %30 : vector<64x128xf32>
    %32 = math.log %31 : vector<64x128xf32>
    %33 = arith.addf %19, %32 : vector<64x128xf32>
    %34 = arith.negf %33 : vector<64x128xf32>
    %35 = math.exp %34 : vector<64x128xf32>
    %cst_24 = arith.constant 1.000000e+00 : f32
    %36 = vector.broadcast %cst_24 : f32 to vector<64x128xf32>
    %37 = arith.addf %36, %35 : vector<64x128xf32>
    %38 = arith.divf %36, %37 : vector<64x128xf32>
    %c0_25 = arith.constant 0 : index
    %c0_26 = arith.constant 0 : index
    %39 = vector.load %arg19[%c0_25, %c0_26] : memref<64x128xf32, #tpu.memory_space<vmem>>, vector<64x128xf32>
    tpu.vector_store %arg19[%c0_25, %c0_26], %38 {strides = array<i32>} : memref<64x128xf32, #tpu.memory_space<vmem>>, vector<64x128xf32>,
    %c0_27 = arith.constant 0 : index
    %c0_28 = arith.constant 0 : index
    %40 = vector.load %arg1[%c0_27, %c0_28] : memref<32x64xf32, #tpu.memory_space<vmem>>, vector<32x64xf32>
    %c0_29 = arith.constant 0 : index
    %c0_30 = arith.constant 0 : index
    %41 = vector.load %arg2[%c0_29, %c0_30] : memref<1x64xf32, #tpu.memory_space<vmem>>, vector<1x64xf32>
    %c0_31 = arith.constant 0 : index
    %c0_32 = arith.constant 0 : index
    %42 = vector.load %arg13[%c0_31, %c0_32] : memref<64x16xf32, #tpu.memory_space<vmem>>, vector<64x16xf32>
    %c0_33 = arith.constant 0 : index
    %c0_34 = arith.constant 0 : index
    %43 = vector.load %arg14[%c0_33, %c0_34] : memref<64x1xf32, #tpu.memory_space<vmem>>, vector<64x1xf32>
    %c0_35 = arith.constant 0 : index
    %c0_36 = arith.constant 0 : index
    %44 = vector.load %arg15[%c0_35, %c0_36] : memref<64x1xf32, #tpu.memory_space<vmem>>, vector<64x1xf32>
    %c0_37 = arith.constant 0 : index
    %c0_38 = arith.constant 0 : index
    %45 = vector.load %arg16[%c0_37, %c0_38] : memref<64x1xf32, #tpu.memory_space<vmem>>, vector<64x1xf32>
    %c0_39 = arith.constant 0 : index
    %c0_40 = arith.constant 0 : index
    %46 = vector.load %arg17[%c0_39, %c0_40] : memref<64x64xf32, #tpu.memory_space<vmem>>, vector<64x64xf32>
    %cst_41 = arith.constant 5.120000e+02 : f32
    %c0_i32 = arith.constant 0 : i32
    %47 = arith.index_cast %c0_i32 : i32 to index
    %c0_42 = arith.constant 0 : index
    %c0_43 = arith.constant 0 : index
    %48 = vector.load %arg0[%47, %c0_42, %c0_43] : memref<2x128x32xf32, #tpu.memory_space<vmem>>, vector<1x128x32xf32>
    %49 = vector.shape_cast %48 : vector<1x128x32xf32> to vector<128x32xf32>
    %cst_44 = arith.constant dense<0.000000e+00> : vector<128x64xf32>
    %50 = tpu.matmul %49, %40, %cst_44 {dimension_numbers = #tpu.dot_dimension_numbers<[1], [0], [0], [1], [0, 0, 1, 1], [], []>} : vector<128x32xf32>, vector<32x64xf32>, vector<128x64xf32> -> vector<128x64xf32>
    %51 = vector.broadcast %41 : vector<1x64xf32> to vector<128x64xf32>
    %52 = arith.addf %50, %51 : vector<128x64xf32>
    %c32_i32 = arith.constant 32 : i32
    %53 = arith.muli %c0_i32, %c32_i32 : i32
    %54 = tpu.assume_multiple %53, 32 : i32
    %55 = arith.index_cast %54 : i32 to index
    %c0_45 = arith.constant 0 : index
    %56 = vector.load %arg3[%55, %c0_45] : memref<64x64xf32, #tpu.memory_space<vmem>>, vector<32x64xf32>
    %cst_46 = arith.constant dense<0.000000e+00> : vector<32x128xf32>
    %57 = tpu.matmul %56, %52, %cst_46 {dimension_numbers = #tpu.dot_dimension_numbers<[1], [1], [0], [0], [0, 0, 1, 0], [], []>} : vector<32x64xf32>, vector<128x64xf32>, vector<32x128xf32> -> vector<32x128xf32>
    %58 = arith.index_cast %c0_i32 : i32 to index
    %c0_47 = arith.constant 0 : index
    %c0_48 = arith.constant 0 : index
    %59 = vector.load %arg11[%58, %c0_47, %c0_48] : memref<2x1x128xf32, #tpu.memory_space<vmem>>, vector<1x1x128xf32>
    %60 = vector.shape_cast %59 : vector<1x1x128xf32> to vector<1x128xf32>
    %61 = vector.broadcast %60 : vector<1x128xf32> to vector<32x128xf32>
    %62 = arith.addf %57, %61 : vector<32x128xf32>
    %63 = arith.index_cast %c0_i32 : i32 to index
    %c0_49 = arith.constant 0 : index
    %c0_50 = arith.constant 0 : index
    %64 = vector.load %arg18[%63, %c0_49, %c0_50] : memref<2x32x128xf32, #tpu.memory_space<vmem>>, vector<1x32x128xf32>
    %65 = vector.shape_cast %64 : vector<1x32x128xf32> to vector<32x128xf32>
    %66 = vector.shape_cast %62 : vector<32x128xf32> to vector<1x32x128xf32>
    tpu.vector_store %arg18[%63, %c0_49, %c0_50], %66 {strides = array<i32>} : memref<2x32x128xf32, #tpu.memory_space<vmem>>, vector<1x32x128xf32>,
    %67 = arith.index_cast %c0_i32 : i32 to index
    %c0_51 = arith.constant 0 : index
    %c0_52 = arith.constant 0 : index
    %68 = vector.load %arg12[%67, %c0_51, %c0_52] : memref<2x16x256xf32, #tpu.memory_space<vmem>>, vector<1x16x256xf32>
    %69 = vector.shape_cast %68 : vector<1x16x256xf32> to vector<16x256xf32>
    %cst_53 = arith.constant dense<0.000000e+00> : vector<64x256xf32>
    %70 = tpu.matmul %42, %69, %cst_53 {dimension_numbers = #tpu.dot_dimension_numbers<[1], [0], [0], [1], [0, 0, 1, 1], [], []>} : vector<64x16xf32>, vector<16x256xf32>, vector<64x256xf32> -> vector<64x256xf32>
    %71 = vector.broadcast %43 : vector<64x1xf32> to vector<64x256xf32>
    %72 = arith.addf %70, %71 : vector<64x256xf32>
    %cst_54 = arith.constant dense<0.000000e+00> : vector<64xf32>
    %73 = vector.multi_reduction <add>, %72, %cst_54 [1] : vector<64x256xf32> to vector<64xf32>
    %74 = vector.shape_cast %73 : vector<64xf32> to vector<64x1xf32>
    %cst_55 = arith.constant dense<0.000000e+00> : vector<64x1xf32>
    %75 = tpu.matmul %46, %74, %cst_55 {dimension_numbers = #tpu.dot_dimension_numbers<[1], [0], [0], [1], [0, 0, 1, 1], [], []>} : vector<64x64xf32>, vector<64x1xf32>, vector<64x1xf32> -> vector<64x1xf32>
    %76 = vector.broadcast %cst_41 : f32 to vector<64x1xf32>
    %77 = arith.divf %75, %76 : vector<64x1xf32>
    %78 = vector.broadcast %77 : vector<64x1xf32> to vector<64x256xf32>
    %79 = arith.subf %72, %78 : vector<64x256xf32>
    %80 = arith.mulf %79, %79 : vector<64x256xf32>
    %cst_56 = arith.constant dense<0.000000e+00> : vector<64xf32>
    %81 = vector.multi_reduction <add>, %80, %cst_56 [1] : vector<64x256xf32> to vector<64xf32>
    %82 = vector.shape_cast %81 : vector<64xf32> to vector<64x1xf32>
    %cst_57 = arith.constant dense<0.000000e+00> : vector<64x1xf32>
    %83 = tpu.matmul %46, %82, %cst_57 {dimension_numbers = #tpu.dot_dimension_numbers<[1], [0], [0], [1], [0, 0, 1, 1], [], []>} : vector<64x64xf32>, vector<64x1xf32>, vector<64x1xf32> -> vector<64x1xf32>
    %84 = vector.broadcast %cst_41 : f32 to vector<64x1xf32>
    %85 = arith.divf %83, %84 : vector<64x1xf32>
    %cst_58 = arith.constant 9.99999974E-6 : f32
    %86 = vector.broadcast %cst_58 : f32 to vector<64x1xf32>
    %87 = arith.addf %85, %86 : vector<64x1xf32>
    %88 = math.rsqrt %87 : vector<64x1xf32>
    %89 = vector.broadcast %88 : vector<64x1xf32> to vector<64x256xf32>
    %90 = arith.mulf %79, %89 : vector<64x256xf32>
    %91 = vector.broadcast %44 : vector<64x1xf32> to vector<64x256xf32>
    %92 = arith.mulf %90, %91 : vector<64x256xf32>
    %93 = vector.broadcast %45 : vector<64x1xf32> to vector<64x256xf32>
    %94 = arith.addf %92, %93 : vector<64x256xf32>
    %95 = arith.index_cast %c0_i32 : i32 to index
    %c0_59 = arith.constant 0 : index
    %c0_60 = arith.constant 0 : index
    %96 = vector.load %arg20[%95, %c0_59, %c0_60] : memref<2x64x256xf32, #tpu.memory_space<vmem>>, vector<1x64x256xf32>
    %97 = vector.shape_cast %96 : vector<1x64x256xf32> to vector<64x256xf32>
    %98 = vector.shape_cast %94 : vector<64x256xf32> to vector<1x64x256xf32>
    tpu.vector_store %arg20[%95, %c0_59, %c0_60], %98 {strides = array<i32>} : memref<2x64x256xf32, #tpu.memory_space<vmem>>, vector<1x64x256xf32>,
    %c1_i32 = arith.constant 1 : i32
    %99 = arith.index_cast %c1_i32 : i32 to index
    %c0_61 = arith.constant 0 : index
    %c0_62 = arith.constant 0 : index
    %100 = vector.load %arg0[%99, %c0_61, %c0_62] : memref<2x128x32xf32, #tpu.memory_space<vmem>>, vector<1x128x32xf32>
    %101 = vector.shape_cast %100 : vector<1x128x32xf32> to vector<128x32xf32>
    %cst_63 = arith.constant dense<0.000000e+00> : vector<128x64xf32>
    %102 = tpu.matmul %101, %40, %cst_63 {dimension_numbers = #tpu.dot_dimension_numbers<[1], [0], [0], [1], [0, 0, 1, 1], [], []>} : vector<128x32xf32>, vector<32x64xf32>, vector<128x64xf32> -> vector<128x64xf32>
    %103 = vector.broadcast %41 : vector<1x64xf32> to vector<128x64xf32>
    %104 = arith.addf %102, %103 : vector<128x64xf32>
    %c32_i32_64 = arith.constant 32 : i32
    %105 = arith.muli %c1_i32, %c32_i32_64 : i32
    %106 = tpu.assume_multiple %105, 32 : i32
    %107 = arith.index_cast %106 : i32 to index
    %c0_65 = arith.constant 0 : index
    %108 = vector.load %arg3[%107, %c0_65] : memref<64x64xf32, #tpu.memory_space<vmem>>, vector<32x64xf32>
    %cst_66 = arith.constant dense<0.000000e+00> : vector<32x128xf32>
    %109 = tpu.matmul %108, %104, %cst_66 {dimension_numbers = #tpu.dot_dimension_numbers<[1], [1], [0], [0], [0, 0, 1, 0], [], []>} : vector<32x64xf32>, vector<128x64xf32>, vector<32x128xf32> -> vector<32x128xf32>
    %110 = arith.index_cast %c1_i32 : i32 to index
    %c0_67 = arith.constant 0 : index
    %c0_68 = arith.constant 0 : index
    %111 = vector.load %arg11[%110, %c0_67, %c0_68] : memref<2x1x128xf32, #tpu.memory_space<vmem>>, vector<1x1x128xf32>
    %112 = vector.shape_cast %111 : vector<1x1x128xf32> to vector<1x128xf32>
    %113 = vector.broadcast %112 : vector<1x128xf32> to vector<32x128xf32>
    %114 = arith.addf %109, %113 : vector<32x128xf32>
    %115 = arith.index_cast %c1_i32 : i32 to index
    %c0_69 = arith.constant 0 : index
    %c0_70 = arith.constant 0 : index
    %116 = vector.load %arg18[%115, %c0_69, %c0_70] : memref<2x32x128xf32, #tpu.memory_space<vmem>>, vector<1x32x128xf32>
    %117 = vector.shape_cast %116 : vector<1x32x128xf32> to vector<32x128xf32>
    %118 = vector.shape_cast %114 : vector<32x128xf32> to vector<1x32x128xf32>
    tpu.vector_store %arg18[%115, %c0_69, %c0_70], %118 {strides = array<i32>} : memref<2x32x128xf32, #tpu.memory_space<vmem>>, vector<1x32x128xf32>,
    %119 = arith.index_cast %c1_i32 : i32 to index
    %c0_71 = arith.constant 0 : index
    %c0_72 = arith.constant 0 : index
    %120 = vector.load %arg12[%119, %c0_71, %c0_72] : memref<2x16x256xf32, #tpu.memory_space<vmem>>, vector<1x16x256xf32>
    %121 = vector.shape_cast %120 : vector<1x16x256xf32> to vector<16x256xf32>
    %cst_73 = arith.constant dense<0.000000e+00> : vector<64x256xf32>
    %122 = tpu.matmul %42, %121, %cst_73 {dimension_numbers = #tpu.dot_dimension_numbers<[1], [0], [0], [1], [0, 0, 1, 1], [], []>} : vector<64x16xf32>, vector<16x256xf32>, vector<64x256xf32> -> vector<64x256xf32>
    %123 = vector.broadcast %43 : vector<64x1xf32> to vector<64x256xf32>
    %124 = arith.addf %122, %123 : vector<64x256xf32>
    %cst_74 = arith.constant dense<0.000000e+00> : vector<64xf32>
    %125 = vector.multi_reduction <add>, %124, %cst_74 [1] : vector<64x256xf32> to vector<64xf32>
    %126 = vector.shape_cast %125 : vector<64xf32> to vector<64x1xf32>
    %cst_75 = arith.constant dense<0.000000e+00> : vector<64x1xf32>
    %127 = tpu.matmul %46, %126, %cst_75 {dimension_numbers = #tpu.dot_dimension_numbers<[1], [0], [0], [1], [0, 0, 1, 1], [], []>} : vector<64x64xf32>, vector<64x1xf32>, vector<64x1xf32> -> vector<64x1xf32>
    %128 = vector.broadcast %cst_41 : f32 to vector<64x1xf32>
    %129 = arith.divf %127, %128 : vector<64x1xf32>
    %130 = vector.broadcast %129 : vector<64x1xf32> to vector<64x256xf32>
    %131 = arith.subf %124, %130 : vector<64x256xf32>
    %132 = arith.mulf %131, %131 : vector<64x256xf32>
    %cst_76 = arith.constant dense<0.000000e+00> : vector<64xf32>
    %133 = vector.multi_reduction <add>, %132, %cst_76 [1] : vector<64x256xf32> to vector<64xf32>
    %134 = vector.shape_cast %133 : vector<64xf32> to vector<64x1xf32>
    %cst_77 = arith.constant dense<0.000000e+00> : vector<64x1xf32>
    %135 = tpu.matmul %46, %134, %cst_77 {dimension_numbers = #tpu.dot_dimension_numbers<[1], [0], [0], [1], [0, 0, 1, 1], [], []>} : vector<64x64xf32>, vector<64x1xf32>, vector<64x1xf32> -> vector<64x1xf32>
    %136 = vector.broadcast %cst_41 : f32 to vector<64x1xf32>
    %137 = arith.divf %135, %136 : vector<64x1xf32>
    %cst_78 = arith.constant 9.99999974E-6 : f32
    %138 = vector.broadcast %cst_78 : f32 to vector<64x1xf32>
    %139 = arith.addf %137, %138 : vector<64x1xf32>
    %140 = math.rsqrt %139 : vector<64x1xf32>
    %141 = vector.broadcast %140 : vector<64x1xf32> to vector<64x256xf32>
    %142 = arith.mulf %131, %141 : vector<64x256xf32>
    %143 = vector.broadcast %44 : vector<64x1xf32> to vector<64x256xf32>
    %144 = arith.mulf %142, %143 : vector<64x256xf32>
    %145 = vector.broadcast %45 : vector<64x1xf32> to vector<64x256xf32>
    %146 = arith.addf %144, %145 : vector<64x256xf32>
    %147 = arith.index_cast %c1_i32 : i32 to index
    %c0_79 = arith.constant 0 : index
    %c0_80 = arith.constant 0 : index
    %148 = vector.load %arg20[%147, %c0_79, %c0_80] : memref<2x64x256xf32, #tpu.memory_space<vmem>>, vector<1x64x256xf32>
    %149 = vector.shape_cast %148 : vector<1x64x256xf32> to vector<64x256xf32>
    %150 = vector.shape_cast %146 : vector<64x256xf32> to vector<1x64x256xf32>
    tpu.vector_store %arg20[%147, %c0_79, %c0_80], %150 {strides = array<i32>} : memref<2x64x256xf32, #tpu.memory_space<vmem>>, vector<1x64x256xf32>,
    %c2_i32 = arith.constant 2 : i32
    return
  }
}

</mosaic_0001>

<llo_original>
// kernel: forward.1
$region0: #{forward.1}
  #allocation0 [shape = 'u32[]', space=smem, size = 0x4, offset = 0x4, fixed_abs, tag = 'smem constant byte address 0x4 - core index']
  #allocation1 [shape = 'u32[144,128]{1,0:T(1,128)}', space=vmem, size = 0x12000, scoped, tag = 'internal scratch']
  %s0 = inlined_call_operand.vmem [shape: f32[2,128,32], index: 0, kind: input, shape index: {}]
  %s1 = inlined_call_operand.vmem [shape: f32[32,64], index: 1, kind: input, shape index: {}]
  %s2 = inlined_call_operand.vmem [shape: f32[1,64], index: 2, kind: input, shape index: {}]
  %s3 = inlined_call_operand.vmem [shape: f32[64,64], index: 3, kind: input, shape index: {}]
  %s4 = inlined_call_operand.vmem [shape: f32[64,128], index: 4, kind: input, shape index: {}]
  %s5 = inlined_call_operand.vmem [shape: f32[64,64], index: 5, kind: input, shape index: {}]
  %s6 = inlined_call_operand.vmem [shape: f32[1,64], index: 6, kind: input, shape index: {}]
  %s7 = inlined_call_operand.vmem [shape: f32[64,64], index: 7, kind: input, shape index: {}]
  %s8 = inlined_call_operand.vmem [shape: f32[1,64], index: 8, kind: input, shape index: {}]
  %s9 = inlined_call_operand.vmem [shape: f32[64,128], index: 9, kind: input, shape index: {}]
  %s10 = inlined_call_operand.vmem [shape: f32[1,128], index: 10, kind: input, shape index: {}]
  %s11 = inlined_call_operand.vmem [shape: f32[2,1,128], index: 11, kind: input, shape index: {}]
  %s12 = inlined_call_operand.vmem [shape: f32[2,16,256], index: 12, kind: input, shape index: {}]
  %s13 = inlined_call_operand.vmem [shape: f32[64,16], index: 13, kind: input, shape index: {}]
  %s14 = inlined_call_operand.vmem [shape: f32[64,1], index: 14, kind: input, shape index: {}]
  %s15 = inlined_call_operand.vmem [shape: f32[64,1], index: 15, kind: input, shape index: {}]
  %s16 = inlined_call_operand.vmem [shape: f32[64,1], index: 16, kind: input, shape index: {}]
  %s17 = inlined_call_operand.vmem [shape: f32[64,64], index: 17, kind: input, shape index: {}]
  %s18 = inlined_call_operand.vmem [shape: f32[2,32,128], index: 18, kind: output, shape index: {0}]
  %s19 = inlined_call_operand.vmem [shape: f32[64,128], index: 19, kind: output, shape index: {1}]
  %s20 = inlined_call_operand.vmem [shape: f32[2,64,256], index: 20, kind: output, shape index: {2}]
  %21 = xla_tuple %s18, %s19, %s20
  %s22 = sld [smem:[#allocation0]]
  $region98: #{forward.1} parent=0
    _
  %s24 = ssub.s32 1, %s22
  %s25 = scalar_select 0, %s24, %s22
  // Predicated region
  $region2: #{forward.1} parent=0 // pred_check
    _
  $region3: #{forward.1} parent=0 // pred_check_branch
    %27 = sbr.rel (0) target = $region5
  $region4: #{forward.1} parent=0 // pred_region
    _
  $region5: #{forward.1} parent=0 // pred_fallthru
    _
  // Predicated region
  $region6: #{forward.1} parent=0 // pred_check
    _
  $region7: #{forward.1} parent=0 // pred_check_branch
    %29 = sbr.rel (0) target = $region9
  $region8: #{forward.1} parent=0 // pred_region
    _
  $region9: #{forward.1} parent=0 // pred_fallthru
    _
  // Predicated region
  $region10: #{forward.1} parent=0 // pred_check
    _
  $region11: #{forward.1} parent=0 // pred_check_branch
    %31 = sbr.rel (0) target = $region13
  $region12: #{forward.1} parent=0 // pred_region
    _
  $region13: #{forward.1} parent=0 // pred_fallthru
    _
  // Predicated region
  $region14: #{forward.1} parent=0 // pred_check
    _
  $region15: #{forward.1} parent=0 // pred_check_branch
    %33 = sbr.rel (0) target = $region17
  $region16: #{forward.1} parent=0 // pred_region
    _
  $region17: #{forward.1} parent=0 // pred_fallthru
    _
  // Predicated region
  $region18: #{forward.1} parent=0 // pred_check
    _
  $region19: #{forward.1} parent=0 // pred_check_branch
    %35 = sbr.rel (0) target = $region21
  $region20: #{forward.1} parent=0 // pred_region
    _
  $region21: #{forward.1} parent=0 // pred_fallthru
    _
  // Predicated region
  $region22: #{forward.1} parent=0 // pred_check
    _
  $region23: #{forward.1} parent=0 // pred_check_branch
    %37 = sbr.rel (0) target = $region25
  $region24: #{forward.1} parent=0 // pred_region
    _
  $region25: #{forward.1} parent=0 // pred_fallthru
    _
  // Predicated region
  $region26: #{forward.1} parent=0 // pred_check
    _
  $region27: #{forward.1} parent=0 // pred_check_branch
    %39 = sbr.rel (0) target = $region29
  $region28: #{forward.1} parent=0 // pred_region
    _
  $region29: #{forward.1} parent=0 // pred_fallthru
    _
  // Predicated region
  $region30: #{forward.1} parent=0 // pred_check
    _
  $region31: #{forward.1} parent=0 // pred_check_branch
    %41 = sbr.rel (0) target = $region33
  $region32: #{forward.1} parent=0 // pred_region
    _
  $region33: #{forward.1} parent=0 // pred_fallthru
    _
  // Predicated region
  $region34: #{forward.1} parent=0 // pred_check
    _
  $region35: #{forward.1} parent=0 // pred_check_branch
    %43 = sbr.rel (0) target = $region37
  $region36: #{forward.1} parent=0 // pred_region
    _
  $region37: #{forward.1} parent=0 // pred_fallthru
    _
  // Predicated region
  $region38: #{forward.1} parent=0 // pred_check
    _
  $region39: #{forward.1} parent=0 // pred_check_branch
    %45 = sbr.rel (0) target = $region41
  $region40: #{forward.1} parent=0 // pred_region
    _
  $region41: #{forward.1} parent=0 // pred_fallthru
    _
  // Predicated region
  $region42: #{forward.1} parent=0 // pred_check
    _
  $region43: #{forward.1} parent=0 // pred_check_branch
    %47 = sbr.rel (0) target = $region45
  $region44: #{forward.1} parent=0 // pred_region
    _
  $region45: #{forward.1} parent=0 // pred_fallthru
    _
  // Predicated region
  $region46: #{forward.1} parent=0 // pred_check
    _
  $region47: #{forward.1} parent=0 // pred_check_branch
    %49 = sbr.rel (0) target = $region49
  $region48: #{forward.1} parent=0 // pred_region
    _
  $region49: #{forward.1} parent=0 // pred_fallthru
    _
  // Predicated region
  $region50: #{forward.1} parent=0 // pred_check
    _
  $region51: #{forward.1} parent=0 // pred_check_branch
    %51 = sbr.rel (0) target = $region53
  $region52: #{forward.1} parent=0 // pred_region
    _
  $region53: #{forward.1} parent=0 // pred_fallthru
    _
  // Predicated region
  $region54: #{forward.1} parent=0 // pred_check
    _
  $region55: #{forward.1} parent=0 // pred_check_branch
    %53 = sbr.rel (0) target = $region57
  $region56: #{forward.1} parent=0 // pred_region
    _
  $region57: #{forward.1} parent=0 // pred_fallthru
    _
  // Predicated region
  $region58: #{forward.1} parent=0 // pred_check
    _
  $region59: #{forward.1} parent=0 // pred_check_branch
    %55 = sbr.rel (0) target = $region61
  $region60: #{forward.1} parent=0 // pred_region
    _
  $region61: #{forward.1} parent=0 // pred_fallthru
    _
  // Predicated region
  $region62: #{forward.1} parent=0 // pred_check
    _
  $region63: #{forward.1} parent=0 // pred_check_branch
    %57 = sbr.rel (0) target = $region65
  $region64: #{forward.1} parent=0 // pred_region
    _
  $region65: #{forward.1} parent=0 // pred_fallthru
    _
  // Predicated region
  $region66: #{forward.1} parent=0 // pred_check
    _
  $region67: #{forward.1} parent=0 // pred_check_branch
    %59 = sbr.rel (0) target = $region69
  $region68: #{forward.1} parent=0 // pred_region
    _
  $region69: #{forward.1} parent=0 // pred_fallthru
    _
  // Predicated region
  $region70: #{forward.1} parent=0 // pred_check
    _
  $region71: #{forward.1} parent=0 // pred_check_branch
    %61 = sbr.rel (0) target = $region73
  $region72: #{forward.1} parent=0 // pred_region
    _
  $region73: #{forward.1} parent=0 // pred_fallthru
    _
  %v62 = vld [vmem:[%s3] sm:$0xff]
  %v63 = vld [vmem:[%s3 + $0x8] sm:$0xff]
  %v64 = vld [vmem:[%s3 + $0x10] sm:$0xff]
  %v65 = vld [vmem:[%s3 + $0x18] sm:$0xff]
  %v66 = vld [vmem:[%s3 + $0x20] sm:$0xff]
  %v67 = vld [vmem:[%s3 + $0x28] sm:$0xff]
  %v68 = vld [vmem:[%s3 + $0x30] sm:$0xff]
  %v69 = vld [vmem:[%s3 + $0x38] sm:$0xff]
  %v70 = vld [vmem:[%s5] sm:$0xff]
  %v71 = vld [vmem:[%s5 + $0x8] sm:$0xff]
  %v72 = vld [vmem:[%s5 + $0x10] sm:$0xff]
  %v73 = vld [vmem:[%s5 + $0x18] sm:$0xff]
  %v74 = vld [vmem:[%s5 + $0x20] sm:$0xff]
  %v75 = vld [vmem:[%s5 + $0x28] sm:$0xff]
  %v76 = vld [vmem:[%s5 + $0x30] sm:$0xff]
  %v77 = vld [vmem:[%s5 + $0x38] sm:$0xff]
  %v78 = vld [vmem:[%s6] sm:$0x1]
  %v80 = vlaneseq
  %v81 = vshrl.u32 %v80, 7
  %v82 = vsub.s32 0, %v81
  %v83 = vrot.slane %v78, %v82
  %vm85 = vcmask 523264
  %v87 = vsel %vm85, %v62, 0
  %v90 = vsel %vm85, %v63, 0
  %v93 = vsel %vm85, %v64, 0
  %v96 = vsel %vm85, %v65, 0
  %v99 = vsel %vm85, %v66, 0
  %v102 = vsel %vm85, %v67, 0
  %v105 = vsel %vm85, %v68, 0
  %v108 = vsel %vm85, %v69, 0
  %110 = vmatprep.subr.mxu0 0.0
  %111 = vmatpush1.msra.mxu0 %v70
  %112 = vmatprep.subr.mxu0 0.0
  %113 = vmatpush1.msra.mxu0 %v71
  %114 = vmatprep.subr.mxu0 0.0
  %115 = vmatpush1.msra.mxu0 %v72
  %116 = vmatprep.subr.mxu0 0.0
  %117 = vmatpush1.msra.mxu0 %v73
  %118 = vmatprep.subr.mxu0 0.0
  %119 = vmatpush1.msra.mxu0 %v74
  %120 = vmatprep.subr.mxu0 0.0
  %121 = vmatpush1.msra.mxu0 %v75
  %122 = vmatprep.subr.mxu0 0.0
  %123 = vmatpush1.msra.mxu0 %v76
  %124 = vmatprep.subr.mxu0 0.0
  %125 = vmatpush1.msra.mxu0 %v77
  %126 = vmatprep.subr.mxu0 0.0
  %127 = vmatpush1.msra.mxu0 0.0
  %128 = vmatprep.subr.mxu0 0.0
  %129 = vmatpush1.msra.mxu0 0.0
  %130 = vmatprep.subr.mxu0 0.0
  %131 = vmatpush1.msra.mxu0 0.0
  %132 = vmatprep.subr.mxu0 0.0
  %133 = vmatpush1.msra.mxu0 0.0
  %134 = vmatprep.subr.mxu0 0.0
  %135 = vmatpush1.msra.mxu0 0.0
  %136 = vmatprep.subr.mxu0 0.0
  %137 = vmatpush1.msra.mxu0 0.0
  %138 = vmatprep.subr.mxu0 0.0
  %139 = vmatpush1.msra.mxu0 0.0
  %140 = vmatprep.subr.mxu0 0.0
  %141 = vmatpush1.msra.mxu0 0.0
  %142 = vmatprep.subr.mxu0 0.0
  %143 = vmatpush1.msra.mxu0 0.0
  %144 = vmatprep.subr.mxu0 0.0
  %145 = vmatpush1.msra.mxu0 0.0
  %146 = vmatprep.subr.mxu0 0.0
  %147 = vmatpush1.msra.mxu0 0.0
  %148 = vmatprep.subr.mxu0 0.0
  %149 = vmatpush1.msra.mxu0 0.0
  %150 = vmatprep.subr.mxu0 0.0
  %151 = vmatpush1.msra.mxu0 0.0
  %152 = vmatprep.subr.mxu0 0.0
  %153 = vmatpush1.msra.mxu0 0.0
  %154 = vmatprep.subr.mxu0 0.0
  %155 = vmatpush1.msra.mxu0 0.0
  %156 = vmatprep.subr.mxu0 0.0
  %157 = vmatpush1.msra.mxu0 0.0
  %158 = vmatprep.subr.mxu0 0.0
  %159 = vmatpush1.msra.mxu0 0.0
  %160 = vmatprep.subr.mxu0 0.0
  %161 = vmatpush1.msra.mxu0 0.0
  %162 = vmatprep.subr.mxu0 0.0
  %163 = vmatpush1.msra.mxu0 0.0
  %164 = vmatprep.subr.mxu0 0.0
  %165 = vmatpush1.msra.mxu0 0.0
  %166 = vmatprep.subr.mxu0 0.0
  %167 = vmatpush1.msra.mxu0 0.0
  %168 = vmatprep.subr.mxu0 0.0
  %169 = vmatpush1.msra.mxu0 0.0
  %170 = vmatprep.subr.mxu0 0.0
  %171 = vmatpush1.msra.mxu0 0.0
  %172 = vmatprep.subr.mxu0 0.0
  %173 = vmatpush1.msra.mxu0 0.0
  %174 = vmatprep.mubr.f32.mxu0 0.0
  %175 = vmatmul.mubr.f32.gmra.mrb[0].mxu0 %v87
  %v176 = vpop.f32.mrb[0].mxu0
  %v177 = vadd.f32 %v83, %v176
  %v178 = vpop.f32.mrb[0].mxu0
  %179 = vmatprep.mubr.f32.mxu0 0.0
  %180 = vmatmul.mubr.f32.gmra.mrb[0].mxu0 %v90
  %v181 = vpop.f32.mrb[0].mxu0
  %v182 = vadd.f32 %v83, %v181
  %v183 = vpop.f32.mrb[0].mxu0
  %184 = vmatprep.mubr.f32.mxu0 0.0
  %185 = vmatmul.mubr.f32.gmra.mrb[0].mxu0 %v93
  %v186 = vpop.f32.mrb[0].mxu0
  %v187 = vadd.f32 %v83, %v186
  %v188 = vpop.f32.mrb[0].mxu0
  %189 = vmatprep.mubr.f32.mxu0 0.0
  %190 = vmatmul.mubr.f32.gmra.mrb[0].mxu0 %v96
  %v191 = vpop.f32.mrb[0].mxu0
  %v192 = vadd.f32 %v83, %v191
  %v193 = vpop.f32.mrb[0].mxu0
  %194 = vmatprep.mubr.f32.mxu0 0.0
  %195 = vmatmul.mubr.f32.gmra.mrb[0].mxu0 %v99
  %v196 = vpop.f32.mrb[0].mxu0
  %v197 = vadd.f32 %v83, %v196
  %v198 = vpop.f32.mrb[0].mxu0
  %199 = vmatprep.mubr.f32.mxu0 0.0
  %200 = vmatmul.mubr.f32.gmra.mrb[0].mxu0 %v102
  %v201 = vpop.f32.mrb[0].mxu0
  %v202 = vadd.f32 %v83, %v201
  %v203 = vpop.f32.mrb[0].mxu0
  %204 = vmatprep.mubr.f32.mxu0 0.0
  %205 = vmatmul.mubr.f32.gmra.mrb[0].mxu0 %v105
  %v206 = vpop.f32.mrb[0].mxu0
  %v207 = vadd.f32 %v83, %v206
  %v208 = vpop.f32.mrb[0].mxu0
  %209 = vmatprep.mubr.f32.mxu0 0.0
  %210 = vmatmul.mubr.f32.gmra.mrb[0].mxu0 %v108
  %v211 = vpop.f32.mrb[0].mxu0
  %v212 = vadd.f32 %v83, %v211
  %v213 = vpop.f32.mrb[0].mxu0
  %214 = vdwg.mxu0
  %v215 = vmax.f32 %v177, 0.0
  %v216 = vmax.f32 %v182, 0.0
  %v217 = vmax.f32 %v187, 0.0
  %v218 = vmax.f32 %v192, 0.0
  %v219 = vmax.f32 %v197, 0.0
  %v220 = vmax.f32 %v202, 0.0
  %v221 = vmax.f32 %v207, 0.0
  %v222 = vmax.f32 %v212, 0.0
  %v223 = vld [vmem:[%s7] sm:$0xff]
  %v224 = vld [vmem:[%s7 + $0x8] sm:$0xff]
  %v225 = vld [vmem:[%s7 + $0x10] sm:$0xff]
  %v226 = vld [vmem:[%s7 + $0x18] sm:$0xff]
  %v227 = vld [vmem:[%s7 + $0x20] sm:$0xff]
  %v228 = vld [vmem:[%s7 + $0x28] sm:$0xff]
  %v229 = vld [vmem:[%s7 + $0x30] sm:$0xff]
  %v230 = vld [vmem:[%s7 + $0x38] sm:$0xff]
  %v231 = vld [vmem:[%s8] sm:$0x1]
  %v233 = vlaneseq
  %v234 = vshrl.u32 %v233, 7
  %v235 = vsub.s32 0, %v234
  %v236 = vrot.slane %v231, %v235
  %v239 = vsel %vm85, %v215, 0
  %v242 = vsel %vm85, %v216, 0
  %v245 = vsel %vm85, %v217, 0
  %v248 = vsel %vm85, %v218, 0
  %v251 = vsel %vm85, %v219, 0
  %v254 = vsel %vm85, %v220, 0
  %v257 = vsel %vm85, %v221, 0
  %v260 = vsel %vm85, %v222, 0
  %262 = vmatprep.subr.mxu0 0.0
  %263 = vmatpush1.msra.mxu0 %v223
  %264 = vmatprep.subr.mxu0 0.0
  %265 = vmatpush1.msra.mxu0 %v224
  %266 = vmatprep.subr.mxu0 0.0
  %267 = vmatpush1.msra.mxu0 %v225
  %268 = vmatprep.subr.mxu0 0.0
  %269 = vmatpush1.msra.mxu0 %v226
  %270 = vmatprep.subr.mxu0 0.0
  %271 = vmatpush1.msra.mxu0 %v227
  %272 = vmatprep.subr.mxu0 0.0
  %273 = vmatpush1.msra.mxu0 %v228
  %274 = vmatprep.subr.mxu0 0.0
  %275 = vmatpush1.msra.mxu0 %v229
  %276 = vmatprep.subr.mxu0 0.0
  %277 = vmatpush1.msra.mxu0 %v230
  %278 = vmatprep.subr.mxu0 0.0
  %279 = vmatpush1.msra.mxu0 0.0
  %280 = vmatprep.subr.mxu0 0.0
  %281 = vmatpush1.msra.mxu0 0.0
  %282 = vmatprep.subr.mxu0 0.0
  %283 = vmatpush1.msra.mxu0 0.0
  %284 = vmatprep.subr.mxu0 0.0
  %285 = vmatpush1.msra.mxu0 0.0
  %286 = vmatprep.subr.mxu0 0.0
  %287 = vmatpush1.msra.mxu0 0.0
  %288 = vmatprep.subr.mxu0 0.0
  %289 = vmatpush1.msra.mxu0 0.0
  %290 = vmatprep.subr.mxu0 0.0
  %291 = vmatpush1.msra.mxu0 0.0
  %292 = vmatprep.subr.mxu0 0.0
  %293 = vmatpush1.msra.mxu0 0.0
  %294 = vmatprep.subr.mxu0 0.0
  %295 = vmatpush1.msra.mxu0 0.0
  %296 = vmatprep.subr.mxu0 0.0
  %297 = vmatpush1.msra.mxu0 0.0
  %298 = vmatprep.subr.mxu0 0.0
  %299 = vmatpush1.msra.mxu0 0.0
  %300 = vmatprep.subr.mxu0 0.0
  %301 = vmatpush1.msra.mxu0 0.0
  %302 = vmatprep.subr.mxu0 0.0
  %303 = vmatpush1.msra.mxu0 0.0
  %304 = vmatprep.subr.mxu0 0.0
  %305 = vmatpush1.msra.mxu0 0.0
  %306 = vmatprep.subr.mxu0 0.0
  %307 = vmatpush1.msra.mxu0 0.0
  %308 = vmatprep.subr.mxu0 0.0
  %309 = vmatpush1.msra.mxu0 0.0
  %310 = vmatprep.subr.mxu0 0.0
  %311 = vmatpush1.msra.mxu0 0.0
  %312 = vmatprep.subr.mxu0 0.0
  %313 = vmatpush1.msra.mxu0 0.0
  %314 = vmatprep.subr.mxu0 0.0
  %315 = vmatpush1.msra.mxu0 0.0
  %316 = vmatprep.subr.mxu0 0.0
  %317 = vmatpush1.msra.mxu0 0.0
  %318 = vmatprep.subr.mxu0 0.0
  %319 = vmatpush1.msra.mxu0 0.0
  %320 = vmatprep.subr.mxu0 0.0
  %321 = vmatpush1.msra.mxu0 0.0
  %322 = vmatprep.subr.mxu0 0.0
  %323 = vmatpush1.msra.mxu0 0.0
  %324 = vmatprep.subr.mxu0 0.0
  %325 = vmatpush1.msra.mxu0 0.0
  %326 = vmatprep.mubr.f32.mxu0 0.0
  %327 = vmatmul.mubr.f32.gmra.mrb[0].mxu0 %v239
  %v328 = vpop.f32.mrb[0].mxu0
  %v329 = vadd.f32 %v236, %v328
  %v330 = vpop.f32.mrb[0].mxu0
  %331 = vmatprep.mubr.f32.mxu0 0.0
  %332 = vmatmul.mubr.f32.gmra.mrb[0].mxu0 %v242
  %v333 = vpop.f32.mrb[0].mxu0
  %v334 = vadd.f32 %v236, %v333
  %v335 = vpop.f32.mrb[0].mxu0
  %336 = vmatprep.mubr.f32.mxu0 0.0
  %337 = vmatmul.mubr.f32.gmra.mrb[0].mxu0 %v245
  %v338 = vpop.f32.mrb[0].mxu0
  %v339 = vadd.f32 %v236, %v338
  %v340 = vpop.f32.mrb[0].mxu0
  %341 = vmatprep.mubr.f32.mxu0 0.0
  %342 = vmatmul.mubr.f32.gmra.mrb[0].mxu0 %v248
  %v343 = vpop.f32.mrb[0].mxu0
  %v344 = vadd.f32 %v236, %v343
  %v345 = vpop.f32.mrb[0].mxu0
  %346 = vmatprep.mubr.f32.mxu0 0.0
  %347 = vmatmul.mubr.f32.gmra.mrb[0].mxu0 %v251
  %v348 = vpop.f32.mrb[0].mxu0
  %v349 = vadd.f32 %v236, %v348
  %v350 = vpop.f32.mrb[0].mxu0
  %351 = vmatprep.mubr.f32.mxu0 0.0
  %352 = vmatmul.mubr.f32.gmra.mrb[0].mxu0 %v254
  %v353 = vpop.f32.mrb[0].mxu0
  %v354 = vadd.f32 %v236, %v353
  %v355 = vpop.f32.mrb[0].mxu0
  %356 = vmatprep.mubr.f32.mxu0 0.0
  %357 = vmatmul.mubr.f32.gmra.mrb[0].mxu0 %v257
  %v358 = vpop.f32.mrb[0].mxu0
  %v359 = vadd.f32 %v236, %v358
  %v360 = vpop.f32.mrb[0].mxu0
  %361 = vmatprep.mubr.f32.mxu0 0.0
  %362 = vmatmul.mubr.f32.gmra.mrb[0].mxu0 %v260
  %v363 = vpop.f32.mrb[0].mxu0
  %v364 = vadd.f32 %v236, %v363
  %v365 = vpop.f32.mrb[0].mxu0
  %366 = vdwg.mxu0
  %v367 = vmax.f32 %v329, 0.0
  %v368 = vmax.f32 %v334, 0.0
  %v369 = vmax.f32 %v339, 0.0
  %v370 = vmax.f32 %v344, 0.0
  %v371 = vmax.f32 %v349, 0.0
  %v372 = vmax.f32 %v354, 0.0
  %v373 = vmax.f32 %v359, 0.0
  %v374 = vmax.f32 %v364, 0.0
  %v375 = vld [vmem:[%s9] sm:$0xff]
  %v376 = vld [vmem:[%s9 + $0x8] sm:$0xff]
  %v377 = vld [vmem:[%s9 + $0x10] sm:$0xff]
  %v378 = vld [vmem:[%s9 + $0x18] sm:$0xff]
  %v379 = vld [vmem:[%s9 + $0x20] sm:$0xff]
  %v380 = vld [vmem:[%s9 + $0x28] sm:$0xff]
  %v381 = vld [vmem:[%s9 + $0x30] sm:$0xff]
  %v382 = vld [vmem:[%s9 + $0x38] sm:$0xff]
  %v383 = vld [vmem:[%s10] sm:$0x1]
  %v385 = vlaneseq
  %v386 = vshrl.u32 %v385, 7
  %v387 = vsub.s32 0, %v386
  %v388 = vrot.slane %v383, %v387
  %v391 = vsel %vm85, %v367, 0
  %v394 = vsel %vm85, %v368, 0
  %v397 = vsel %vm85, %v369, 0
  %v400 = vsel %vm85, %v370, 0
  %v403 = vsel %vm85, %v371, 0
  %v406 = vsel %vm85, %v372, 0
  %v409 = vsel %vm85, %v373, 0
  %v412 = vsel %vm85, %v374, 0
  %414 = vmatprep.subr.mxu0 0.0
  %415 = vmatpush1.msra.mxu0 %v375
  %416 = vmatprep.subr.mxu0 0.0
  %417 = vmatpush1.msra.mxu0 %v376
  %418 = vmatprep.subr.mxu0 0.0
  %419 = vmatpush1.msra.mxu0 %v377
  %420 = vmatprep.subr.mxu0 0.0
  %421 = vmatpush1.msra.mxu0 %v378
  %422 = vmatprep.subr.mxu0 0.0
  %423 = vmatpush1.msra.mxu0 %v379
  %424 = vmatprep.subr.mxu0 0.0
  %425 = vmatpush1.msra.mxu0 %v380
  %426 = vmatprep.subr.mxu0 0.0
  %427 = vmatpush1.msra.mxu0 %v381
  %428 = vmatprep.subr.mxu0 0.0
  %429 = vmatpush1.msra.mxu0 %v382
  %430 = vmatprep.subr.mxu0 0.0
  %431 = vmatpush1.msra.mxu0 0.0
  %432 = vmatprep.subr.mxu0 0.0
  %433 = vmatpush1.msra.mxu0 0.0
  %434 = vmatprep.subr.mxu0 0.0
  %435 = vmatpush1.msra.mxu0 0.0
  %436 = vmatprep.subr.mxu0 0.0
  %437 = vmatpush1.msra.mxu0 0.0
  %438 = vmatprep.subr.mxu0 0.0
  %439 = vmatpush1.msra.mxu0 0.0
  %440 = vmatprep.subr.mxu0 0.0
  %441 = vmatpush1.msra.mxu0 0.0
  %442 = vmatprep.subr.mxu0 0.0
  %443 = vmatpush1.msra.mxu0 0.0
  %444 = vmatprep.subr.mxu0 0.0
  %445 = vmatpush1.msra.mxu0 0.0
  %446 = vmatprep.subr.mxu0 0.0
  %447 = vmatpush1.msra.mxu0 0.0
  %448 = vmatprep.subr.mxu0 0.0
  %449 = vmatpush1.msra.mxu0 0.0
  %450 = vmatprep.subr.mxu0 0.0
  %451 = vmatpush1.msra.mxu0 0.0
  %452 = vmatprep.subr.mxu0 0.0
  %453 = vmatpush1.msra.mxu0 0.0
  %454 = vmatprep.subr.mxu0 0.0
  %455 = vmatpush1.msra.mxu0 0.0
  %456 = vmatprep.subr.mxu0 0.0
  %457 = vmatpush1.msra.mxu0 0.0
  %458 = vmatprep.subr.mxu0 0.0
  %459 = vmatpush1.msra.mxu0 0.0
  %460 = vmatprep.subr.mxu0 0.0
  %461 = vmatpush1.msra.mxu0 0.0
  %462 = vmatprep.subr.mxu0 0.0
  %463 = vmatpush1.msra.mxu0 0.0
  %464 = vmatprep.subr.mxu0 0.0
  %465 = vmatpush1.msra.mxu0 0.0
  %466 = vmatprep.subr.mxu0 0.0
  %467 = vmatpush1.msra.mxu0 0.0
  %468 = vmatprep.subr.mxu0 0.0
  %469 = vmatpush1.msra.mxu0 0.0
  %470 = vmatprep.subr.mxu0 0.0
  %471 = vmatpush1.msra.mxu0 0.0
  %472 = vmatprep.subr.mxu0 0.0
  %473 = vmatpush1.msra.mxu0 0.0
  %474 = vmatprep.subr.mxu0 0.0
  %475 = vmatpush1.msra.mxu0 0.0
  %476 = vmatprep.subr.mxu0 0.0
  %477 = vmatpush1.msra.mxu0 0.0
  %478 = vmatprep.mubr.f32.mxu0 0.0
  %479 = vmatmul.mubr.f32.gmra.mrb[0].mxu0 %v391
  %v480 = vpop.f32.mrb[0].mxu0
  %v481 = vadd.f32 %v388, %v480
  %v482 = vpop.f32.mrb[0].mxu0
  %483 = vmatprep.mubr.f32.mxu0 0.0
  %484 = vmatmul.mubr.f32.gmra.mrb[0].mxu0 %v394
  %v485 = vpop.f32.mrb[0].mxu0
  %v486 = vadd.f32 %v388, %v485
  %v487 = vpop.f32.mrb[0].mxu0
  %488 = vmatprep.mubr.f32.mxu0 0.0
  %489 = vmatmul.mubr.f32.gmra.mrb[0].mxu0 %v397
  %v490 = vpop.f32.mrb[0].mxu0
  %v491 = vadd.f32 %v388, %v490
  %v492 = vpop.f32.mrb[0].mxu0
  %493 = vmatprep.mubr.f32.mxu0 0.0
  %494 = vmatmul.mubr.f32.gmra.mrb[0].mxu0 %v400
  %v495 = vpop.f32.mrb[0].mxu0
  %v496 = vadd.f32 %v388, %v495
  %v497 = vpop.f32.mrb[0].mxu0
  %498 = vmatprep.mubr.f32.mxu0 0.0
  %499 = vmatmul.mubr.f32.gmra.mrb[0].mxu0 %v403
  %v500 = vpop.f32.mrb[0].mxu0
  %v501 = vadd.f32 %v388, %v500
  %v502 = vpop.f32.mrb[0].mxu0
  %503 = vmatprep.mubr.f32.mxu0 0.0
  %504 = vmatmul.mubr.f32.gmra.mrb[0].mxu0 %v406
  %v505 = vpop.f32.mrb[0].mxu0
  %v506 = vadd.f32 %v388, %v505
  %v507 = vpop.f32.mrb[0].mxu0
  %508 = vmatprep.mubr.f32.mxu0 0.0
  %509 = vmatmul.mubr.f32.gmra.mrb[0].mxu0 %v409
  %v510 = vpop.f32.mrb[0].mxu0
  %v511 = vadd.f32 %v388, %v510
  %v512 = vpop.f32.mrb[0].mxu0
  %513 = vmatprep.mubr.f32.mxu0 0.0
  %514 = vmatmul.mubr.f32.gmra.mrb[0].mxu0 %v412
  %v515 = vpop.f32.mrb[0].mxu0
  %v516 = vadd.f32 %v388, %v515
  %v517 = vpop.f32.mrb[0].mxu0
  %518 = vdwg.mxu0
  %v519 = vld [vmem:[%s4] sm:$0xff]
  %v520 = vld [vmem:[%s4 + $0x8] sm:$0xff]
  %v521 = vld [vmem:[%s4 + $0x10] sm:$0xff]
  %v522 = vld [vmem:[%s4 + $0x18] sm:$0xff]
  %v523 = vld [vmem:[%s4 + $0x20] sm:$0xff]
  %v524 = vld [vmem:[%s4 + $0x28] sm:$0xff]
  %v525 = vld [vmem:[%s4 + $0x30] sm:$0xff]
  %v526 = vld [vmem:[%s4 + $0x38] sm:$0xff]
  %v527 = vmax.f32 %v519, 0.0
  %v528 = vmax.f32 %v520, 0.0
  %v529 = vmax.f32 %v521, 0.0
  %v530 = vmax.f32 %v522, 0.0
  %v531 = vmax.f32 %v523, 0.0
  %v532 = vmax.f32 %v524, 0.0
  %v533 = vmax.f32 %v525, 0.0
  %v534 = vmax.f32 %v526, 0.0
  %v535 = vmin.f32 %v527, 1.0
  %v536 = vmin.f32 %v528, 1.0
  %v537 = vmin.f32 %v529, 1.0
  %v538 = vmin.f32 %v530, 1.0
  %v539 = vmin.f32 %v531, 1.0
  %v540 = vmin.f32 %v532, 1.0
  %v541 = vmin.f32 %v533, 1.0
  %v542 = vmin.f32 %v534, 1.0
  %v543 = vmax.f32 %v535, 0.001
  %v544 = vmax.f32 %v536, 0.001
  %v545 = vmax.f32 %v537, 0.001
  %v546 = vmax.f32 %v538, 0.001
  %v547 = vmax.f32 %v539, 0.001
  %v548 = vmax.f32 %v540, 0.001
  %v549 = vmax.f32 %v541, 0.001
  %v550 = vmax.f32 %v542, 0.001
  %v551 = vsub.f32 1.0, %v535
  %v552 = vsub.f32 1.0, %v536
  %v553 = vsub.f32 1.0, %v537
  %v554 = vsub.f32 1.0, %v538
  %v555 = vsub.f32 1.0, %v539
  %v556 = vsub.f32 1.0, %v540
  %v557 = vsub.f32 1.0, %v541
  %v558 = vsub.f32 1.0, %v542
  %v559 = vmax.f32 %v551, 0.001
  %v560 = vmax.f32 %v552, 0.001
  %v561 = vmax.f32 %v553, 0.001
  %v562 = vmax.f32 %v554, 0.001
  %v563 = vmax.f32 %v555, 0.001
  %v564 = vmax.f32 %v556, 0.001
  %v565 = vmax.f32 %v557, 0.001
  %v566 = vmax.f32 %v558, 0.001
  %v567 = vrcp.pop %v559
  %v568 = vmul.f32 %v543, %v567
  %v569 = vrcp.pop %v560
  %v570 = vmul.f32 %v544, %v569
  %v571 = vrcp.pop %v561
  %v572 = vmul.f32 %v545, %v571
  %v573 = vrcp.pop %v562
  %v574 = vmul.f32 %v546, %v573
  %v575 = vrcp.pop %v563
  %v576 = vmul.f32 %v547, %v575
  %v577 = vrcp.pop %v564
  %v578 = vmul.f32 %v548, %v577
  %v579 = vrcp.pop %v565
  %v580 = vmul.f32 %v549, %v579
  %v581 = vrcp.pop %v566
  %v582 = vmul.f32 %v550, %v581
  %v583 = vlog2.pop %v568
  %v584 = vmul.f32 %v583, 0.6931472
  %v585 = vlog2.pop %v570
  %v586 = vmul.f32 %v585, 0.6931472
  %v587 = vlog2.pop %v572
  %v588 = vmul.f32 %v587, 0.6931472
  %v589 = vlog2.pop %v574
  %v590 = vmul.f32 %v589, 0.6931472
  %v591 = vlog2.pop %v576
  %v592 = vmul.f32 %v591, 0.6931472
  %v593 = vlog2.pop %v578
  %v594 = vmul.f32 %v593, 0.6931472
  %v595 = vlog2.pop %v580
  %v596 = vmul.f32 %v595, 0.6931472
  %v597 = vlog2.pop %v582
  %v598 = vmul.f32 %v597, 0.6931472
  %v599 = vadd.f32 %v481, %v584
  %v600 = vadd.f32 %v486, %v586
  %v601 = vadd.f32 %v491, %v588
  %v602 = vadd.f32 %v496, %v590
  %v603 = vadd.f32 %v501, %v592
  %v604 = vadd.f32 %v506, %v594
  %v605 = vadd.f32 %v511, %v596
  %v606 = vadd.f32 %v516, %v598
  %v607 = vxor.u32 %v599, 2147483648
  %v608 = vxor.u32 %v600, 2147483648
  %v609 = vxor.u32 %v601, 2147483648
  %v610 = vxor.u32 %v602, 2147483648
  %v611 = vxor.u32 %v603, 2147483648
  %v612 = vxor.u32 %v604, 2147483648
  %v613 = vxor.u32 %v605, 2147483648
  %v614 = vxor.u32 %v606, 2147483648
  %v615 = vmul.f32 %v607, 1.442695
  %v616 = vpow.pop %v615
  %v617 = vmul.f32 %v608, 1.442695
  %v618 = vpow.pop %v617
  %v619 = vmul.f32 %v609, 1.442695
  %v620 = vpow.pop %v619
  %v621 = vmul.f32 %v610, 1.442695
  %v622 = vpow.pop %v621
  %v623 = vmul.f32 %v611, 1.442695
  %v624 = vpow.pop %v623
  %v625 = vmul.f32 %v612, 1.442695
  %v626 = vpow.pop %v625
  %v627 = vmul.f32 %v613, 1.442695
  %v628 = vpow.pop %v627
  %v629 = vmul.f32 %v614, 1.442695
  %v630 = vpow.pop %v629
  %v631 = vadd.f32 %v616, 1.0
  %v632 = vadd.f32 %v618, 1.0
  %v633 = vadd.f32 %v620, 1.0
  %v634 = vadd.f32 %v622, 1.0
  %v635 = vadd.f32 %v624, 1.0
  %v636 = vadd.f32 %v626, 1.0
  %v637 = vadd.f32 %v628, 1.0
  %v638 = vadd.f32 %v630, 1.0
  %v639 = vrcp.pop %v631
  %v640 = vmul.f32 1.0, %v639
  %v641 = vrcp.pop %v632
  %v642 = vmul.f32 1.0, %v641
  %v643 = vrcp.pop %v633
  %v644 = vmul.f32 1.0, %v643
  %v645 = vrcp.pop %v634
  %v646 = vmul.f32 1.0, %v645
  %v647 = vrcp.pop %v635
  %v648 = vmul.f32 1.0, %v647
  %v649 = vrcp.pop %v636
  %v650 = vmul.f32 1.0, %v649
  %v651 = vrcp.pop %v637
  %v652 = vmul.f32 1.0, %v651
  %v653 = vrcp.pop %v638
  %v654 = vmul.f32 1.0, %v653
  %655 = vst [vmem:[%s19] sm:$0xff] %v640
  %656 = vst [vmem:[%s19 + $0x8] sm:$0xff] %v642
  %657 = vst [vmem:[%s19 + $0x10] sm:$0xff] %v644
  %658 = vst [vmem:[%s19 + $0x18] sm:$0xff] %v646
  %659 = vst [vmem:[%s19 + $0x20] sm:$0xff] %v648
  %660 = vst [vmem:[%s19 + $0x28] sm:$0xff] %v650
  %661 = vst [vmem:[%s19 + $0x30] sm:$0xff] %v652
  %662 = vst [vmem:[%s19 + $0x38] sm:$0xff] %v654
  %v663 = vld [vmem:[%s1] sm:$0xff]
  %v664 = vld [vmem:[%s1 + $0x8] sm:$0xff]
  %v665 = vld [vmem:[%s1 + $0x10] sm:$0xff]
  %v666 = vld [vmem:[%s1 + $0x18] sm:$0xff]
  %v667 = vld [vmem:[%s2] sm:$0x1]
  %v668 = vld [vmem:[%s13] sm:$0xff]
  %v669 = vld [vmem:[%s13 + $0x8] sm:$0xff]
  %v670 = vld [vmem:[%s13 + $0x10] sm:$0xff]
  %v671 = vld [vmem:[%s13 + $0x18] sm:$0xff]
  %v672 = vld [vmem:[%s13 + $0x20] sm:$0xff]
  %v673 = vld [vmem:[%s13 + $0x28] sm:$0xff]
  %v674 = vld [vmem:[%s13 + $0x30] sm:$0xff]
  %v675 = vld [vmem:[%s13 + $0x38] sm:$0xff]
  %v676 = vld [vmem:[%s14] sm:$0xff]
  %v677 = vld [vmem:[%s14 + $0x8] sm:$0xff]
  %v678 = vld [vmem:[%s14 + $0x10] sm:$0xff]
  %v679 = vld [vmem:[%s14 + $0x18] sm:$0xff]
  %v680 = vld [vmem:[%s14 + $0x20] sm:$0xff]
  %v681 = vld [vmem:[%s14 + $0x28] sm:$0xff]
  %v682 = vld [vmem:[%s14 + $0x30] sm:$0xff]
  %v683 = vld [vmem:[%s14 + $0x38] sm:$0xff]
  %v684 = vld [vmem:[%s15] sm:$0xff]
  %v685 = vld [vmem:[%s15 + $0x8] sm:$0xff]
  %v686 = vld [vmem:[%s15 + $0x10] sm:$0xff]
  %v687 = vld [vmem:[%s15 + $0x18] sm:$0xff]
  %v688 = vld [vmem:[%s15 + $0x20] sm:$0xff]
  %v689 = vld [vmem:[%s15 + $0x28] sm:$0xff]
  %v690 = vld [vmem:[%s15 + $0x30] sm:$0xff]
  %v691 = vld [vmem:[%s15 + $0x38] sm:$0xff]
  %v692 = vld [vmem:[%s16] sm:$0xff]
  %v693 = vld [vmem:[%s16 + $0x8] sm:$0xff]
  %v694 = vld [vmem:[%s16 + $0x10] sm:$0xff]
  %v695 = vld [vmem:[%s16 + $0x18] sm:$0xff]
  %v696 = vld [vmem:[%s16 + $0x20] sm:$0xff]
  %v697 = vld [vmem:[%s16 + $0x28] sm:$0xff]
  %v698 = vld [vmem:[%s16 + $0x30] sm:$0xff]
  %v699 = vld [vmem:[%s16 + $0x38] sm:$0xff]
  %v700 = vld [vmem:[%s17] sm:$0xff]
  %v701 = vld [vmem:[%s17 + $0x8] sm:$0xff]
  %v702 = vld [vmem:[%s17 + $0x10] sm:$0xff]
  %v703 = vld [vmem:[%s17 + $0x18] sm:$0xff]
  %v704 = vld [vmem:[%s17 + $0x20] sm:$0xff]
  %v705 = vld [vmem:[%s17 + $0x28] sm:$0xff]
  %v706 = vld [vmem:[%s17 + $0x30] sm:$0xff]
  %v707 = vld [vmem:[%s17 + $0x38] sm:$0xff]
  %v708 = vld [vmem:[%s0] sm:$0xff]
  %v709 = vld [vmem:[%s0 + $0x8] sm:$0xff]
  %v710 = vld [vmem:[%s0 + $0x10] sm:$0xff]
  %v711 = vld [vmem:[%s0 + $0x18] sm:$0xff]
  %v712 = vld [vmem:[%s0 + $0x20] sm:$0xff]
  %v713 = vld [vmem:[%s0 + $0x28] sm:$0xff]
  %v714 = vld [vmem:[%s0 + $0x30] sm:$0xff]
  %v715 = vld [vmem:[%s0 + $0x38] sm:$0xff]
  %v716 = vld [vmem:[%s0 + $0x40] sm:$0xff]
  %v717 = vld [vmem:[%s0 + $0x48] sm:$0xff]
  %v718 = vld [vmem:[%s0 + $0x50] sm:$0xff]
  %v719 = vld [vmem:[%s0 + $0x58] sm:$0xff]
  %v720 = vld [vmem:[%s0 + $0x60] sm:$0xff]
  %v721 = vld [vmem:[%s0 + $0x68] sm:$0xff]
  %v722 = vld [vmem:[%s0 + $0x70] sm:$0xff]
  %v723 = vld [vmem:[%s0 + $0x78] sm:$0xff]
  %v725 = vlaneseq
  %v726 = vshrl.u32 %v725, 7
  %v727 = vsub.s32 0, %v726
  %v728 = vrot.slane %v667, %v727
  %vm730 = vcmask 261120
  %v732 = vsel %vm730, %v708, 0
  %v735 = vsel %vm730, %v709, 0
  %v738 = vsel %vm730, %v710, 0
  %v741 = vsel %vm730, %v711, 0
  %v744 = vsel %vm730, %v712, 0
  %v747 = vsel %vm730, %v713, 0
  %v750 = vsel %vm730, %v714, 0
  %v753 = vsel %vm730, %v715, 0
  %v756 = vsel %vm730, %v716, 0
  %v759 = vsel %vm730, %v717, 0
  %v762 = vsel %vm730, %v718, 0
  %v765 = vsel %vm730, %v719, 0
  %v768 = vsel %vm730, %v720, 0
  %v771 = vsel %vm730, %v721, 0
  %v774 = vsel %vm730, %v722, 0
  %v777 = vsel %vm730, %v723, 0
  %779 = vmatprep.subr.mxu0 0.0
  %780 = vmatpush1.msra.mxu0 %v663
  %781 = vmatprep.subr.mxu0 0.0
  %782 = vmatpush1.msra.mxu0 %v664
  %783 = vmatprep.subr.mxu0 0.0
  %784 = vmatpush1.msra.mxu0 %v665
  %785 = vmatprep.subr.mxu0 0.0
  %786 = vmatpush1.msra.mxu0 %v666
  %787 = vmatprep.subr.mxu0 0.0
  %788 = vmatpush1.msra.mxu0 0.0
  %789 = vmatprep.subr.mxu0 0.0
  %790 = vmatpush1.msra.mxu0 0.0
  %791 = vmatprep.subr.mxu0 0.0
  %792 = vmatpush1.msra.mxu0 0.0
  %793 = vmatprep.subr.mxu0 0.0
  %794 = vmatpush1.msra.mxu0 0.0
  %795 = vmatprep.subr.mxu0 0.0
  %796 = vmatpush1.msra.mxu0 0.0
  %797 = vmatprep.subr.mxu0 0.0
  %798 = vmatpush1.msra.mxu0 0.0
  %799 = vmatprep.subr.mxu0 0.0
  %800 = vmatpush1.msra.mxu0 0.0
  %801 = vmatprep.subr.mxu0 0.0
  %802 = vmatpush1.msra.mxu0 0.0
  %803 = vmatprep.subr.mxu0 0.0
  %804 = vmatpush1.msra.mxu0 0.0
  %805 = vmatprep.subr.mxu0 0.0
  %806 = vmatpush1.msra.mxu0 0.0
  %807 = vmatprep.subr.mxu0 0.0
  %808 = vmatpush1.msra.mxu0 0.0
  %809 = vmatprep.subr.mxu0 0.0
  %810 = vmatpush1.msra.mxu0 0.0
  %811 = vmatprep.subr.mxu0 0.0
  %812 = vmatpush1.msra.mxu0 0.0
  %813 = vmatprep.subr.mxu0 0.0
  %814 = vmatpush1.msra.mxu0 0.0
  %815 = vmatprep.subr.mxu0 0.0
  %816 = vmatpush1.msra.mxu0 0.0
  %817 = vmatprep.subr.mxu0 0.0
  %818 = vmatpush1.msra.mxu0 0.0
  %819 = vmatprep.subr.mxu0 0.0
  %820 = vmatpush1.msra.mxu0 0.0
  %821 = vmatprep.subr.mxu0 0.0
  %822 = vmatpush1.msra.mxu0 0.0
  %823 = vmatprep.subr.mxu0 0.0
  %824 = vmatpush1.msra.mxu0 0.0
  %825 = vmatprep.subr.mxu0 0.0
  %826 = vmatpush1.msra.mxu0 0.0
  %827 = vmatprep.subr.mxu0 0.0
  %828 = vmatpush1.msra.mxu0 0.0
  %829 = vmatprep.subr.mxu0 0.0
  %830 = vmatpush1.msra.mxu0 0.0
  %831 = vmatprep.subr.mxu0 0.0
  %832 = vmatpush1.msra.mxu0 0.0
  %833 = vmatprep.subr.mxu0 0.0
  %834 = vmatpush1.msra.mxu0 0.0
  %835 = vmatprep.subr.mxu0 0.0
  %836 = vmatpush1.msra.mxu0 0.0
  %837 = vmatprep.subr.mxu0 0.0
  %838 = vmatpush1.msra.mxu0 0.0
  %839 = vmatprep.subr.mxu0 0.0
  %840 = vmatpush1.msra.mxu0 0.0
  %841 = vmatprep.subr.mxu0 0.0
  %842 = vmatpush1.msra.mxu0 0.0
  %843 = vmatprep.mubr.f32.mxu0 0.0
  %844 = vmatmul.mubr.f32.gmra.mrb[0].mxu0 %v732
  %v845 = vpop.f32.mrb[0].mxu0
  %v846 = vadd.f32 %v728, %v845
  %v847 = vpop.f32.mrb[0].mxu0
  %848 = vmatprep.mubr.f32.mxu0 0.0
  %849 = vmatmul.mubr.f32.gmra.mrb[0].mxu0 %v735
  %v850 = vpop.f32.mrb[0].mxu0
  %v851 = vadd.f32 %v728, %v850
  %v852 = vpop.f32.mrb[0].mxu0
  %853 = vmatprep.mubr.f32.mxu0 0.0
  %854 = vmatmul.mubr.f32.gmra.mrb[0].mxu0 %v738
  %v855 = vpop.f32.mrb[0].mxu0
  %v856 = vadd.f32 %v728, %v855
  %v857 = vpop.f32.mrb[0].mxu0
  %858 = vmatprep.mubr.f32.mxu0 0.0
  %859 = vmatmul.mubr.f32.gmra.mrb[0].mxu0 %v741
  %v860 = vpop.f32.mrb[0].mxu0
  %v861 = vadd.f32 %v728, %v860
  %v862 = vpop.f32.mrb[0].mxu0
  %863 = vmatprep.mubr.f32.mxu0 0.0
  %864 = vmatmul.mubr.f32.gmra.mrb[0].mxu0 %v744
  %v865 = vpop.f32.mrb[0].mxu0
  %v866 = vadd.f32 %v728, %v865
  %v867 = vpop.f32.mrb[0].mxu0
  %868 = vmatprep.mubr.f32.mxu0 0.0
  %869 = vmatmul.mubr.f32.gmra.mrb[0].mxu0 %v747
  %v870 = vpop.f32.mrb[0].mxu0
  %v871 = vadd.f32 %v728, %v870
  %v872 = vpop.f32.mrb[0].mxu0
  %873 = vmatprep.mubr.f32.mxu0 0.0
  %874 = vmatmul.mubr.f32.gmra.mrb[0].mxu0 %v750
  %v875 = vpop.f32.mrb[0].mxu0
  %v876 = vadd.f32 %v728, %v875
  %v877 = vpop.f32.mrb[0].mxu0
  %878 = vmatprep.mubr.f32.mxu0 0.0
  %879 = vmatmul.mubr.f32.gmra.mrb[0].mxu0 %v753
  %v880 = vpop.f32.mrb[0].mxu0
  %v881 = vadd.f32 %v728, %v880
  %v882 = vpop.f32.mrb[0].mxu0
  %883 = vmatprep.mubr.f32.mxu0 0.0
  %884 = vmatmul.mubr.f32.gmra.mrb[0].mxu0 %v756
  %v885 = vpop.f32.mrb[0].mxu0
  %v886 = vadd.f32 %v728, %v885
  %v887 = vpop.f32.mrb[0].mxu0
  %888 = vmatprep.mubr.f32.mxu0 0.0
  %889 = vmatmul.mubr.f32.gmra.mrb[0].mxu0 %v759
  %v890 = vpop.f32.mrb[0].mxu0
  %v891 = vadd.f32 %v728, %v890
  %v892 = vpop.f32.mrb[0].mxu0
  %893 = vmatprep.mubr.f32.mxu0 0.0
  %894 = vmatmul.mubr.f32.gmra.mrb[0].mxu0 %v762
  %v895 = vpop.f32.mrb[0].mxu0
  %v896 = vadd.f32 %v728, %v895
  %v897 = vpop.f32.mrb[0].mxu0
  %898 = vmatprep.mubr.f32.mxu0 0.0
  %899 = vmatmul.mubr.f32.gmra.mrb[0].mxu0 %v765
  %v900 = vpop.f32.mrb[0].mxu0
  %v901 = vadd.f32 %v728, %v900
  %v902 = vpop.f32.mrb[0].mxu0
  %903 = vmatprep.mubr.f32.mxu0 0.0
  %904 = vmatmul.mubr.f32.gmra.mrb[0].mxu0 %v768
  %v905 = vpop.f32.mrb[0].mxu0
  %v906 = vadd.f32 %v728, %v905
  %v907 = vpop.f32.mrb[0].mxu0
  %908 = vmatprep.mubr.f32.mxu0 0.0
  %909 = vmatmul.mubr.f32.gmra.mrb[0].mxu0 %v771
  %v910 = vpop.f32.mrb[0].mxu0
  %v911 = vadd.f32 %v728, %v910
  %v912 = vpop.f32.mrb[0].mxu0
  %913 = vmatprep.mubr.f32.mxu0 0.0
  %914 = vmatmul.mubr.f32.gmra.mrb[0].mxu0 %v774
  %v915 = vpop.f32.mrb[0].mxu0
  %v916 = vadd.f32 %v728, %v915
  %v917 = vpop.f32.mrb[0].mxu0
  %918 = vmatprep.mubr.f32.mxu0 0.0
  %919 = vmatmul.mubr.f32.gmra.mrb[0].mxu0 %v777
  %v920 = vpop.f32.mrb[0].mxu0
  %v921 = vadd.f32 %v728, %v920
  %v922 = vpop.f32.mrb[0].mxu0
  %923 = vdwg.mxu0
  %v924 = vld [vmem:[%s3] sm:$0xff]
  %v925 = vld [vmem:[%s3 + $0x8] sm:$0xff]
  %v926 = vld [vmem:[%s3 + $0x10] sm:$0xff]
  %v927 = vld [vmem:[%s3 + $0x18] sm:$0xff]
  %v928 = vld [vmem:[%s11] sm:$0x1]
  %v930 = vlaneseq
  %v931 = vshrl.u32 %v930, 7
  %v932 = vsub.s32 0, %v931
  %v933 = vrot.slane %v928, %v932
  %v936 = vsel %vm85, %v924, 0
  %v939 = vsel %vm85, %v925, 0
  %v942 = vsel %vm85, %v926, 0
  %v945 = vsel %vm85, %v927, 0
  %v948 = vsel %vm85, %v846, 0
  %v951 = vsel %vm85, %v851, 0
  %v954 = vsel %vm85, %v856, 0
  %v957 = vsel %vm85, %v861, 0
  %v960 = vsel %vm85, %v866, 0
  %v963 = vsel %vm85, %v871, 0
  %v966 = vsel %vm85, %v876, 0
  %v969 = vsel %vm85, %v881, 0
  %v972 = vsel %vm85, %v886, 0
  %v975 = vsel %vm85, %v891, 0
  %v978 = vsel %vm85, %v896, 0
  %v981 = vsel %vm85, %v901, 0
  %v984 = vsel %vm85, %v906, 0
  %v987 = vsel %vm85, %v911, 0
  %v990 = vsel %vm85, %v916, 0
  %v993 = vsel %vm85, %v921, 0
  %995 = vmatprep.subr.mxu0 0.0
  %996 = vmatpush1.xpose.msra.mxu0 %v948
  %997 = vmatprep.subr.mxu0 0.0
  %998 = vmatpush1.xpose.msra.mxu0 %v951
  %999 = vmatprep.subr.mxu0 0.0
  %1000 = vmatpush1.xpose.msra.mxu0 %v954
  %1001 = vmatprep.subr.mxu0 0.0
  %1002 = vmatpush1.xpose.msra.mxu0 %v957
  %1003 = vmatprep.subr.mxu0 0.0
  %1004 = vmatpush1.xpose.msra.mxu0 %v960
  %1005 = vmatprep.subr.mxu0 0.0
  %1006 = vmatpush1.xpose.msra.mxu0 %v963
  %1007 = vmatprep.subr.mxu0 0.0
  %1008 = vmatpush1.xpose.msra.mxu0 %v966
  %1009 = vmatprep.subr.mxu0 0.0
  %1010 = vmatpush1.xpose.msra.mxu0 %v969
  %1011 = vmatprep.subr.mxu0 0.0
  %1012 = vmatpush1.xpose.msra.mxu0 %v972
  %1013 = vmatprep.subr.mxu0 0.0
  %1014 = vmatpush1.xpose.msra.mxu0 %v975
  %1015 = vmatprep.subr.mxu0 0.0
  %1016 = vmatpush1.xpose.msra.mxu0 %v978
  %1017 = vmatprep.subr.mxu0 0.0
  %1018 = vmatpush1.xpose.msra.mxu0 %v981
  %1019 = vmatprep.subr.mxu0 0.0
  %1020 = vmatpush1.xpose.msra.mxu0 %v984
  %1021 = vmatprep.subr.mxu0 0.0
  %1022 = vmatpush1.xpose.msra.mxu0 %v987
  %1023 = vmatprep.subr.mxu0 0.0
  %1024 = vmatpush1.xpose.msra.mxu0 %v990
  %1025 = vmatprep.subr.mxu0 0.0
  %1026 = vmatpush1.xpose.msra.mxu0 %v993
  %1027 = vmatprep.subr.mxu0 0.0
  %1028 = vmatpush1.xpose.msra.mxu0 0.0
  %1029 = vmatprep.subr.mxu0 0.0
  %1030 = vmatpush1.xpose.msra.mxu0 0.0
  %1031 = vmatprep.subr.mxu0 0.0
  %1032 = vmatpush1.xpose.msra.mxu0 0.0
  %1033 = vmatprep.subr.mxu0 0.0
  %1034 = vmatpush1.xpose.msra.mxu0 0.0
  %1035 = vmatprep.subr.mxu0 0.0
  %1036 = vmatpush1.xpose.msra.mxu0 0.0
  %1037 = vmatprep.subr.mxu0 0.0
  %1038 = vmatpush1.xpose.msra.mxu0 0.0
  %1039 = vmatprep.subr.mxu0 0.0
  %1040 = vmatpush1.xpose.msra.mxu0 0.0
  %1041 = vmatprep.subr.mxu0 0.0
  %1042 = vmatpush1.xpose.msra.mxu0 0.0
  %1043 = vmatprep.subr.mxu0 0.0
  %1044 = vmatpush1.xpose.msra.mxu0 0.0
  %1045 = vmatprep.subr.mxu0 0.0
  %1046 = vmatpush1.xpose.msra.mxu0 0.0
  %1047 = vmatprep.subr.mxu0 0.0
  %1048 = vmatpush1.xpose.msra.mxu0 0.0
  %1049 = vmatprep.subr.mxu0 0.0
  %1050 = vmatpush1.xpose.msra.mxu0 0.0
  %1051 = vmatprep.subr.mxu0 0.0
  %1052 = vmatpush1.xpose.msra.mxu0 0.0
  %1053 = vmatprep.subr.mxu0 0.0
  %1054 = vmatpush1.xpose.msra.mxu0 0.0
  %1055 = vmatprep.subr.mxu0 0.0
  %1056 = vmatpush1.xpose.msra.mxu0 0.0
  %1057 = vmatprep.subr.mxu0 0.0
  %1058 = vmatpush1.xpose.msra.mxu0 0.0
  %1059 = vmatprep.mubr.f32.mxu0 0.0
  %1060 = vmatmul.mubr.f32.gmra.mrb[0].mxu0 %v936
  %v1061 = vpop.f32.mrb[0].mxu0
  %v1062 = vadd.f32 %v933, %v1061
  %v1063 = vpop.f32.mrb[0].mxu0
  %1064 = vmatprep.mubr.f32.mxu0 0.0
  %1065 = vmatmul.mubr.f32.gmra.mrb[0].mxu0 %v939
  %v1066 = vpop.f32.mrb[0].mxu0
  %v1067 = vadd.f32 %v933, %v1066
  %v1068 = vpop.f32.mrb[0].mxu0
  %1069 = vmatprep.mubr.f32.mxu0 0.0
  %1070 = vmatmul.mubr.f32.gmra.mrb[0].mxu0 %v942
  %v1071 = vpop.f32.mrb[0].mxu0
  %v1072 = vadd.f32 %v933, %v1071
  %v1073 = vpop.f32.mrb[0].mxu0
  %1074 = vmatprep.mubr.f32.mxu0 0.0
  %1075 = vmatmul.mubr.f32.gmra.mrb[0].mxu0 %v945
  %v1076 = vpop.f32.mrb[0].mxu0
  %v1077 = vadd.f32 %v933, %v1076
  %v1078 = vpop.f32.mrb[0].mxu0
  %1079 = vdwg.mxu0
  %1080 = vst [vmem:[%s18] sm:$0xff] %v1062
  %1081 = vst [vmem:[%s18 + $0x8] sm:$0xff] %v1067
  %1082 = vst [vmem:[%s18 + $0x10] sm:$0xff] %v1072
  %1083 = vst [vmem:[%s18 + $0x18] sm:$0xff] %v1077
  %v1084 = vld [vmem:[%s12] sm:$0xff]
  %v1085 = vld [vmem:[%s12 + $0x8] sm:$0xff]
  %v1086 = vld [vmem:[%s12 + $0x10] sm:$0xff]
  %v1087 = vld [vmem:[%s12 + $0x18] sm:$0xff]
  %1089 = vset.pattern.permute.xlu0 0
  %1090 = vperm.xlu0 %1089, %v676
  %v1091 = vpop.permute.xlu0 %1090
  %1094 = vset.pattern.permute.xlu0 0
  %1095 = vperm.xlu0 %1094, %v677
  %v1096 = vpop.permute.xlu0 %1095
  %1099 = vset.pattern.permute.xlu0 0
  %1100 = vperm.xlu0 %1099, %v678
  %v1101 = vpop.permute.xlu0 %1100
  %1104 = vset.pattern.permute.xlu0 0
  %1105 = vperm.xlu0 %1104, %v679
  %v1106 = vpop.permute.xlu0 %1105
  %1109 = vset.pattern.permute.xlu0 0
  %1110 = vperm.xlu0 %1109, %v680
  %v1111 = vpop.permute.xlu0 %1110
  %1114 = vset.pattern.permute.xlu0 0
  %1115 = vperm.xlu0 %1114, %v681
  %v1116 = vpop.permute.xlu0 %1115
  %1119 = vset.pattern.permute.xlu0 0
  %1120 = vperm.xlu0 %1119, %v682
  %v1121 = vpop.permute.xlu0 %1120
  %1124 = vset.pattern.permute.xlu0 0
  %1125 = vperm.xlu0 %1124, %v683
  %v1126 = vpop.permute.xlu0 %1125
  %vm1128 = vcmask 130048
  %v1130 = vsel %vm1128, %v668, 0
  %v1133 = vsel %vm1128, %v669, 0
  %v1136 = vsel %vm1128, %v670, 0
  %v1139 = vsel %vm1128, %v671, 0
  %v1142 = vsel %vm1128, %v672, 0
  %v1145 = vsel %vm1128, %v673, 0
  %v1148 = vsel %vm1128, %v674, 0
  %v1151 = vsel %vm1128, %v675, 0
  %1153 = vmatprep.subr.mxu0 %v1085
  %1154 = vmatpush1.msra.mxu0 %v1084
  %1155 = vmatprep.subr.mxu0 %v1087
  %1156 = vmatpush1.msra.mxu0 %v1086
  %1157 = vmatprep.subr.mxu0 0.0
  %1158 = vmatpush1.msra.mxu0 0.0
  %1159 = vmatprep.subr.mxu0 0.0
  %1160 = vmatpush1.msra.mxu0 0.0
  %1161 = vmatprep.subr.mxu0 0.0
  %1162 = vmatpush1.msra.mxu0 0.0
  %1163 = vmatprep.subr.mxu0 0.0
  %1164 = vmatpush1.msra.mxu0 0.0
  %1165 = vmatprep.subr.mxu0 0.0
  %1166 = vmatpush1.msra.mxu0 0.0
  %1167 = vmatprep.subr.mxu0 0.0
  %1168 = vmatpush1.msra.mxu0 0.0
  %1169 = vmatprep.subr.mxu0 0.0
  %1170 = vmatpush1.msra.mxu0 0.0
  %1171 = vmatprep.subr.mxu0 0.0
  %1172 = vmatpush1.msra.mxu0 0.0
  %1173 = vmatprep.subr.mxu0 0.0
  %1174 = vmatpush1.msra.mxu0 0.0
  %1175 = vmatprep.subr.mxu0 0.0
  %1176 = vmatpush1.msra.mxu0 0.0
  %1177 = vmatprep.subr.mxu0 0.0
  %1178 = vmatpush1.msra.mxu0 0.0
  %1179 = vmatprep.subr.mxu0 0.0
  %1180 = vmatpush1.msra.mxu0 0.0
  %1181 = vmatprep.subr.mxu0 0.0
  %1182 = vmatpush1.msra.mxu0 0.0
  %1183 = vmatprep.subr.mxu0 0.0
  %1184 = vmatpush1.msra.mxu0 0.0
  %1185 = vmatprep.subr.mxu0 0.0
  %1186 = vmatpush1.msra.mxu0 0.0
  %1187 = vmatprep.subr.mxu0 0.0
  %1188 = vmatpush1.msra.mxu0 0.0
  %1189 = vmatprep.subr.mxu0 0.0
  %1190 = vmatpush1.msra.mxu0 0.0
  %1191 = vmatprep.subr.mxu0 0.0
  %1192 = vmatpush1.msra.mxu0 0.0
  %1193 = vmatprep.subr.mxu0 0.0
  %1194 = vmatpush1.msra.mxu0 0.0
  %1195 = vmatprep.subr.mxu0 0.0
  %1196 = vmatpush1.msra.mxu0 0.0
  %1197 = vmatprep.subr.mxu0 0.0
  %1198 = vmatpush1.msra.mxu0 0.0
  %1199 = vmatprep.subr.mxu0 0.0
  %1200 = vmatpush1.msra.mxu0 0.0
  %1201 = vmatprep.subr.mxu0 0.0
  %1202 = vmatpush1.msra.mxu0 0.0
  %1203 = vmatprep.subr.mxu0 0.0
  %1204 = vmatpush1.msra.mxu0 0.0
  %1205 = vmatprep.subr.mxu0 0.0
  %1206 = vmatpush1.msra.mxu0 0.0
  %1207 = vmatprep.subr.mxu0 0.0
  %1208 = vmatpush1.msra.mxu0 0.0
  %1209 = vmatprep.subr.mxu0 0.0
  %1210 = vmatpush1.msra.mxu0 0.0
  %1211 = vmatprep.subr.mxu0 0.0
  %1212 = vmatpush1.msra.mxu0 0.0
  %1213 = vmatprep.subr.mxu0 0.0
  %1214 = vmatpush1.msra.mxu0 0.0
  %1215 = vmatprep.subr.mxu0 0.0
  %1216 = vmatpush1.msra.mxu0 0.0
  %1217 = vmatprep.mubr.f32.mxu0 0.0
  %1218 = vmatmul.mubr.f32.gmra.mrb[0].mxu0 %v1130
  %v1219 = vpop.f32.mrb[0].mxu0
  %v1220 = vadd.f32 %v1091, %v1219
  %v1221 = vpop.f32.mrb[0].mxu0
  %v1222 = vadd.f32 %v1091, %v1221
  %1223 = vmatprep.mubr.f32.mxu0 0.0
  %1224 = vmatmul.mubr.f32.gmra.mrb[0].mxu0 %v1133
  %v1225 = vpop.f32.mrb[0].mxu0
  %v1226 = vadd.f32 %v1096, %v1225
  %v1227 = vpop.f32.mrb[0].mxu0
  %v1228 = vadd.f32 %v1096, %v1227
  %1229 = vmatprep.mubr.f32.mxu0 0.0
  %1230 = vmatmul.mubr.f32.gmra.mrb[0].mxu0 %v1136
  %v1231 = vpop.f32.mrb[0].mxu0
  %v1232 = vadd.f32 %v1101, %v1231
  %v1233 = vpop.f32.mrb[0].mxu0
  %v1234 = vadd.f32 %v1101, %v1233
  %1235 = vmatprep.mubr.f32.mxu0 0.0
  %1236 = vmatmul.mubr.f32.gmra.mrb[0].mxu0 %v1139
  %v1237 = vpop.f32.mrb[0].mxu0
  %v1238 = vadd.f32 %v1106, %v1237
  %v1239 = vpop.f32.mrb[0].mxu0
  %v1240 = vadd.f32 %v1106, %v1239
  %1241 = vmatprep.mubr.f32.mxu0 0.0
  %1242 = vmatmul.mubr.f32.gmra.mrb[0].mxu0 %v1142
  %v1243 = vpop.f32.mrb[0].mxu0
  %v1244 = vadd.f32 %v1111, %v1243
  %v1245 = vpop.f32.mrb[0].mxu0
  %v1246 = vadd.f32 %v1111, %v1245
  %1247 = vmatprep.mubr.f32.mxu0 0.0
  %1248 = vmatmul.mubr.f32.gmra.mrb[0].mxu0 %v1145
  %v1249 = vpop.f32.mrb[0].mxu0
  %v1250 = vadd.f32 %v1116, %v1249
  %v1251 = vpop.f32.mrb[0].mxu0
  %v1252 = vadd.f32 %v1116, %v1251
  %1253 = vmatprep.mubr.f32.mxu0 0.0
  %1254 = vmatmul.mubr.f32.gmra.mrb[0].mxu0 %v1148
  %v1255 = vpop.f32.mrb[0].mxu0
  %v1256 = vadd.f32 %v1121, %v1255
  %v1257 = vpop.f32.mrb[0].mxu0
  %v1258 = vadd.f32 %v1121, %v1257
  %1259 = vmatprep.mubr.f32.mxu0 0.0
  %1260 = vmatmul.mubr.f32.gmra.mrb[0].mxu0 %v1151
  %v1261 = vpop.f32.mrb[0].mxu0
  %v1262 = vadd.f32 %v1126, %v1261
  %v1263 = vpop.f32.mrb[0].mxu0
  %v1264 = vadd.f32 %v1126, %v1263
  %1265 = vdwg.mxu0
  %v1266 = vadd.f32 %v1220, %v1222
  %1267 = vadd.xlane.f32.xlu0 %v1266
  %v1268 = vpop.xlane.xlu0 %1267
  %v1269 = vadd.f32 %v1226, %v1228
  %1270 = vadd.xlane.f32.xlu0 %v1269
  %v1271 = vpop.xlane.xlu0 %1270
  %v1272 = vadd.f32 %v1232, %v1234
  %1273 = vadd.xlane.f32.xlu0 %v1272
  %v1274 = vpop.xlane.xlu0 %1273
  %v1275 = vadd.f32 %v1238, %v1240
  %1276 = vadd.xlane.f32.xlu0 %v1275
  %v1277 = vpop.xlane.xlu0 %1276
  %v1278 = vadd.f32 %v1244, %v1246
  %1279 = vadd.xlane.f32.xlu0 %v1278
  %v1280 = vpop.xlane.xlu0 %1279
  %v1281 = vadd.f32 %v1250, %v1252
  %1282 = vadd.xlane.f32.xlu0 %v1281
  %v1283 = vpop.xlane.xlu0 %1282
  %v1284 = vadd.f32 %v1256, %v1258
  %1285 = vadd.xlane.f32.xlu0 %v1284
  %v1286 = vpop.xlane.xlu0 %1285
  %v1287 = vadd.f32 %v1262, %v1264
  %1288 = vadd.xlane.f32.xlu0 %v1287
  %v1289 = vpop.xlane.xlu0 %1288
  %v1291 = vsel %vm85, %v700, 0
  %v1294 = vsel %vm85, %v701, 0
  %v1297 = vsel %vm85, %v702, 0
  %v1300 = vsel %vm85, %v703, 0
  %v1303 = vsel %vm85, %v704, 0
  %v1306 = vsel %vm85, %v705, 0
  %v1309 = vsel %vm85, %v706, 0
  %v1312 = vsel %vm85, %v707, 0
  %1314 = vmatprep.subr.mxu0 0.0
  %1315 = vmatpush1.msra.mxu0 %v1268
  %1316 = vmatprep.subr.mxu0 0.0
  %1317 = vmatpush1.msra.mxu0 %v1271
  %1318 = vmatprep.subr.mxu0 0.0
  %1319 = vmatpush1.msra.mxu0 %v1274
  %1320 = vmatprep.subr.mxu0 0.0
  %1321 = vmatpush1.msra.mxu0 %v1277
  %1322 = vmatprep.subr.mxu0 0.0
  %1323 = vmatpush1.msra.mxu0 %v1280
  %1324 = vmatprep.subr.mxu0 0.0
  %1325 = vmatpush1.msra.mxu0 %v1283
  %1326 = vmatprep.subr.mxu0 0.0
  %1327 = vmatpush1.msra.mxu0 %v1286
  %1328 = vmatprep.subr.mxu0 0.0
  %1329 = vmatpush1.msra.mxu0 %v1289
  %1330 = vmatprep.subr.mxu0 0.0
  %1331 = vmatpush1.msra.mxu0 0.0
  %1332 = vmatprep.subr.mxu0 0.0
  %1333 = vmatpush1.msra.mxu0 0.0
  %1334 = vmatprep.subr.mxu0 0.0
  %1335 = vmatpush1.msra.mxu0 0.0
  %1336 = vmatprep.subr.mxu0 0.0
  %1337 = vmatpush1.msra.mxu0 0.0
  %1338 = vmatprep.subr.mxu0 0.0
  %1339 = vmatpush1.msra.mxu0 0.0
  %1340 = vmatprep.subr.mxu0 0.0
  %1341 = vmatpush1.msra.mxu0 0.0
  %1342 = vmatprep.subr.mxu0 0.0
  %1343 = vmatpush1.msra.mxu0 0.0
  %1344 = vmatprep.subr.mxu0 0.0
  %1345 = vmatpush1.msra.mxu0 0.0
  %1346 = vmatprep.subr.mxu0 0.0
  %1347 = vmatpush1.msra.mxu0 0.0
  %1348 = vmatprep.subr.mxu0 0.0
  %1349 = vmatpush1.msra.mxu0 0.0
  %1350 = vmatprep.subr.mxu0 0.0
  %1351 = vmatpush1.msra.mxu0 0.0
  %1352 = vmatprep.subr.mxu0 0.0
  %1353 = vmatpush1.msra.mxu0 0.0
  %1354 = vmatprep.subr.mxu0 0.0
  %1355 = vmatpush1.msra.mxu0 0.0
  %1356 = vmatprep.subr.mxu0 0.0
  %1357 = vmatpush1.msra.mxu0 0.0
  %1358 = vmatprep.subr.mxu0 0.0
  %1359 = vmatpush1.msra.mxu0 0.0
  %1360 = vmatprep.subr.mxu0 0.0
  %1361 = vmatpush1.msra.mxu0 0.0
  %1362 = vmatprep.subr.mxu0 0.0
  %1363 = vmatpush1.msra.mxu0 0.0
  %1364 = vmatprep.subr.mxu0 0.0
  %1365 = vmatpush1.msra.mxu0 0.0
  %1366 = vmatprep.subr.mxu0 0.0
  %1367 = vmatpush1.msra.mxu0 0.0
  %1368 = vmatprep.subr.mxu0 0.0
  %1369 = vmatpush1.msra.mxu0 0.0
  %1370 = vmatprep.subr.mxu0 0.0
  %1371 = vmatpush1.msra.mxu0 0.0
  %1372 = vmatprep.subr.mxu0 0.0
  %1373 = vmatpush1.msra.mxu0 0.0
  %1374 = vmatprep.subr.mxu0 0.0
  %1375 = vmatpush1.msra.mxu0 0.0
  %1376 = vmatprep.subr.mxu0 0.0
  %1377 = vmatpush1.msra.mxu0 0.0
  %1378 = vmatprep.mubr.f32.mxu0 0.0
  %1379 = vmatmul.mubr.f32.gmra.mrb[0].mxu0 %v1291
  %v1380 = vpop.f32.mrb[0].mxu0
  %v1381 = vadd.f32 0.0, %v1380
  %v1382 = vpop.f32.mrb[0].mxu0
  %1383 = vmatprep.mubr.f32.mxu0 0.0
  %1384 = vmatmul.mubr.f32.gmra.mrb[0].mxu0 %v1294
  %v1385 = vpop.f32.mrb[0].mxu0
  %v1386 = vadd.f32 0.0, %v1385
  %v1387 = vpop.f32.mrb[0].mxu0
  %1388 = vmatprep.mubr.f32.mxu0 0.0
  %1389 = vmatmul.mubr.f32.gmra.mrb[0].mxu0 %v1297
  %v1390 = vpop.f32.mrb[0].mxu0
  %v1391 = vadd.f32 0.0, %v1390
  %v1392 = vpop.f32.mrb[0].mxu0
  %1393 = vmatprep.mubr.f32.mxu0 0.0
  %1394 = vmatmul.mubr.f32.gmra.mrb[0].mxu0 %v1300
  %v1395 = vpop.f32.mrb[0].mxu0
  %v1396 = vadd.f32 0.0, %v1395
  %v1397 = vpop.f32.mrb[0].mxu0
  %1398 = vmatprep.mubr.f32.mxu0 0.0
  %1399 = vmatmul.mubr.f32.gmra.mrb[0].mxu0 %v1303
  %v1400 = vpop.f32.mrb[0].mxu0
  %v1401 = vadd.f32 0.0, %v1400
  %v1402 = vpop.f32.mrb[0].mxu0
  %1403 = vmatprep.mubr.f32.mxu0 0.0
  %1404 = vmatmul.mubr.f32.gmra.mrb[0].mxu0 %v1306
  %v1405 = vpop.f32.mrb[0].mxu0
  %v1406 = vadd.f32 0.0, %v1405
  %v1407 = vpop.f32.mrb[0].mxu0
  %1408 = vmatprep.mubr.f32.mxu0 0.0
  %1409 = vmatmul.mubr.f32.gmra.mrb[0].mxu0 %v1309
  %v1410 = vpop.f32.mrb[0].mxu0
  %v1411 = vadd.f32 0.0, %v1410
  %v1412 = vpop.f32.mrb[0].mxu0
  %1413 = vmatprep.mubr.f32.mxu0 0.0
  %1414 = vmatmul.mubr.f32.gmra.mrb[0].mxu0 %v1312
  %v1415 = vpop.f32.mrb[0].mxu0
  %v1416 = vadd.f32 0.0, %v1415
  %v1417 = vpop.f32.mrb[0].mxu0
  %1418 = vdwg.mxu0
  %v1419 = vrcp.pop 512.0
  %v1420 = vmul.f32 %v1381, %v1419
  %v1421 = vmul.f32 %v1386, %v1419
  %v1422 = vmul.f32 %v1391, %v1419
  %v1423 = vmul.f32 %v1396, %v1419
  %v1424 = vmul.f32 %v1401, %v1419
  %v1425 = vmul.f32 %v1406, %v1419
  %v1426 = vmul.f32 %v1411, %v1419
  %v1427 = vmul.f32 %v1416, %v1419
  %1429 = vset.pattern.permute.xlu0 0
  %1430 = vperm.xlu0 %1429, %v1420
  %v1431 = vpop.permute.xlu0 %1430
  %1434 = vset.pattern.permute.xlu0 0
  %1435 = vperm.xlu0 %1434, %v1421
  %v1436 = vpop.permute.xlu0 %1435
  %1439 = vset.pattern.permute.xlu0 0
  %1440 = vperm.xlu0 %1439, %v1422
  %v1441 = vpop.permute.xlu0 %1440
  %1444 = vset.pattern.permute.xlu0 0
  %1445 = vperm.xlu0 %1444, %v1423
  %v1446 = vpop.permute.xlu0 %1445
  %1449 = vset.pattern.permute.xlu0 0
  %1450 = vperm.xlu0 %1449, %v1424
  %v1451 = vpop.permute.xlu0 %1450
  %1454 = vset.pattern.permute.xlu0 0
  %1455 = vperm.xlu0 %1454, %v1425
  %v1456 = vpop.permute.xlu0 %1455
  %1459 = vset.pattern.permute.xlu0 0
  %1460 = vperm.xlu0 %1459, %v1426
  %v1461 = vpop.permute.xlu0 %1460
  %1464 = vset.pattern.permute.xlu0 0
  %1465 = vperm.xlu0 %1464, %v1427
  %v1466 = vpop.permute.xlu0 %1465
  %v1468 = vsub.f32 %v1220, %v1431
  %v1469 = vsub.f32 %v1222, %v1431
  %v1470 = vsub.f32 %v1226, %v1436
  %v1471 = vsub.f32 %v1228, %v1436
  %v1472 = vsub.f32 %v1232, %v1441
  %v1473 = vsub.f32 %v1234, %v1441
  %v1474 = vsub.f32 %v1238, %v1446
  %v1475 = vsub.f32 %v1240, %v1446
  %v1476 = vsub.f32 %v1244, %v1451
  %v1477 = vsub.f32 %v1246, %v1451
  %v1478 = vsub.f32 %v1250, %v1456
  %v1479 = vsub.f32 %v1252, %v1456
  %v1480 = vsub.f32 %v1256, %v1461
  %v1481 = vsub.f32 %v1258, %v1461
  %v1482 = vsub.f32 %v1262, %v1466
  %v1483 = vsub.f32 %v1264, %v1466
  %v1484 = vmul.f32 %v1468, %v1468
  %v1485 = vmul.f32 %v1469, %v1469
  %v1486 = vmul.f32 %v1470, %v1470
  %v1487 = vmul.f32 %v1471, %v1471
  %v1488 = vmul.f32 %v1472, %v1472
  %v1489 = vmul.f32 %v1473, %v1473
  %v1490 = vmul.f32 %v1474, %v1474
  %v1491 = vmul.f32 %v1475, %v1475
  %v1492 = vmul.f32 %v1476, %v1476
  %v1493 = vmul.f32 %v1477, %v1477
  %v1494 = vmul.f32 %v1478, %v1478
  %v1495 = vmul.f32 %v1479, %v1479
  %v1496 = vmul.f32 %v1480, %v1480
  %v1497 = vmul.f32 %v1481, %v1481
  %v1498 = vmul.f32 %v1482, %v1482
  %v1499 = vmul.f32 %v1483, %v1483
  %v1500 = vadd.f32 %v1484, %v1485
  %1501 = vadd.xlane.f32.xlu0 %v1500
  %v1502 = vpop.xlane.xlu0 %1501
  %v1503 = vadd.f32 %v1486, %v1487
  %1504 = vadd.xlane.f32.xlu0 %v1503
  %v1505 = vpop.xlane.xlu0 %1504
  %v1506 = vadd.f32 %v1488, %v1489
  %1507 = vadd.xlane.f32.xlu0 %v1506
  %v1508 = vpop.xlane.xlu0 %1507
  %v1509 = vadd.f32 %v1490, %v1491
  %1510 = vadd.xlane.f32.xlu0 %v1509
  %v1511 = vpop.xlane.xlu0 %1510
  %v1512 = vadd.f32 %v1492, %v1493
  %1513 = vadd.xlane.f32.xlu0 %v1512
  %v1514 = vpop.xlane.xlu0 %1513
  %v1515 = vadd.f32 %v1494, %v1495
  %1516 = vadd.xlane.f32.xlu0 %v1515
  %v1517 = vpop.xlane.xlu0 %1516
  %v1518 = vadd.f32 %v1496, %v1497
  %1519 = vadd.xlane.f32.xlu0 %v1518
  %v1520 = vpop.xlane.xlu0 %1519
  %v1521 = vadd.f32 %v1498, %v1499
  %1522 = vadd.xlane.f32.xlu0 %v1521
  %v1523 = vpop.xlane.xlu0 %1522
  %1524 = vmatprep.subr.mxu0 0.0
  %1525 = vmatpush1.msra.mxu0 %v1502
  %1526 = vmatprep.subr.mxu0 0.0
  %1527 = vmatpush1.msra.mxu0 %v1505
  %1528 = vmatprep.subr.mxu0 0.0
  %1529 = vmatpush1.msra.mxu0 %v1508
  %1530 = vmatprep.subr.mxu0 0.0
  %1531 = vmatpush1.msra.mxu0 %v1511
  %1532 = vmatprep.subr.mxu0 0.0
  %1533 = vmatpush1.msra.mxu0 %v1514
  %1534 = vmatprep.subr.mxu0 0.0
  %1535 = vmatpush1.msra.mxu0 %v1517
  %1536 = vmatprep.subr.mxu0 0.0
  %1537 = vmatpush1.msra.mxu0 %v1520
  %1538 = vmatprep.subr.mxu0 0.0
  %1539 = vmatpush1.msra.mxu0 %v1523
  %1540 = vmatprep.subr.mxu0 0.0
  %1541 = vmatpush1.msra.mxu0 0.0
  %1542 = vmatprep.subr.mxu0 0.0
  %1543 = vmatpush1.msra.mxu0 0.0
  %1544 = vmatprep.subr.mxu0 0.0
  %1545 = vmatpush1.msra.mxu0 0.0
  %1546 = vmatprep.subr.mxu0 0.0
  %1547 = vmatpush1.msra.mxu0 0.0
  %1548 = vmatprep.subr.mxu0 0.0
  %1549 = vmatpush1.msra.mxu0 0.0
  %1550 = vmatprep.subr.mxu0 0.0
  %1551 = vmatpush1.msra.mxu0 0.0
  %1552 = vmatprep.subr.mxu0 0.0
  %1553 = vmatpush1.msra.mxu0 0.0
  %1554 = vmatprep.subr.mxu0 0.0
  %1555 = vmatpush1.msra.mxu0 0.0
  %1556 = vmatprep.subr.mxu0 0.0
  %1557 = vmatpush1.msra.mxu0 0.0
  %1558 = vmatprep.subr.mxu0 0.0
  %1559 = vmatpush1.msra.mxu0 0.0
  %1560 = vmatprep.subr.mxu0 0.0
  %1561 = vmatpush1.msra.mxu0 0.0
  %1562 = vmatprep.subr.mxu0 0.0
  %1563 = vmatpush1.msra.mxu0 0.0
  %1564 = vmatprep.subr.mxu0 0.0
  %1565 = vmatpush1.msra.mxu0 0.0
  %1566 = vmatprep.subr.mxu0 0.0
  %1567 = vmatpush1.msra.mxu0 0.0
  %1568 = vmatprep.subr.mxu0 0.0
  %1569 = vmatpush1.msra.mxu0 0.0
  %1570 = vmatprep.subr.mxu0 0.0
  %1571 = vmatpush1.msra.mxu0 0.0
  %1572 = vmatprep.subr.mxu0 0.0
  %1573 = vmatpush1.msra.mxu0 0.0
  %1574 = vmatprep.subr.mxu0 0.0
  %1575 = vmatpush1.msra.mxu0 0.0
  %1576 = vmatprep.subr.mxu0 0.0
  %1577 = vmatpush1.msra.mxu0 0.0
  %1578 = vmatprep.subr.mxu0 0.0
  %1579 = vmatpush1.msra.mxu0 0.0
  %1580 = vmatprep.subr.mxu0 0.0
  %1581 = vmatpush1.msra.mxu0 0.0
  %1582 = vmatprep.subr.mxu0 0.0
  %1583 = vmatpush1.msra.mxu0 0.0
  %1584 = vmatprep.subr.mxu0 0.0
  %1585 = vmatpush1.msra.mxu0 0.0
  %1586 = vmatprep.subr.mxu0 0.0
  %1587 = vmatpush1.msra.mxu0 0.0
  %1588 = vmatprep.mubr.f32.mxu0 0.0
  %1589 = vmatmul.mubr.f32.gmra.mrb[0].mxu0 %v1291
  %v1590 = vpop.f32.mrb[0].mxu0
  %v1591 = vadd.f32 0.0, %v1590
  %v1592 = vpop.f32.mrb[0].mxu0
  %1593 = vmatprep.mubr.f32.mxu0 0.0
  %1594 = vmatmul.mubr.f32.gmra.mrb[0].mxu0 %v1294
  %v1595 = vpop.f32.mrb[0].mxu0
  %v1596 = vadd.f32 0.0, %v1595
  %v1597 = vpop.f32.mrb[0].mxu0
  %1598 = vmatprep.mubr.f32.mxu0 0.0
  %1599 = vmatmul.mubr.f32.gmra.mrb[0].mxu0 %v1297
  %v1600 = vpop.f32.mrb[0].mxu0
  %v1601 = vadd.f32 0.0, %v1600
  %v1602 = vpop.f32.mrb[0].mxu0
  %1603 = vmatprep.mubr.f32.mxu0 0.0
  %1604 = vmatmul.mubr.f32.gmra.mrb[0].mxu0 %v1300
  %v1605 = vpop.f32.mrb[0].mxu0
  %v1606 = vadd.f32 0.0, %v1605
  %v1607 = vpop.f32.mrb[0].mxu0
  %1608 = vmatprep.mubr.f32.mxu0 0.0
  %1609 = vmatmul.mubr.f32.gmra.mrb[0].mxu0 %v1303
  %v1610 = vpop.f32.mrb[0].mxu0
  %v1611 = vadd.f32 0.0, %v1610
  %v1612 = vpop.f32.mrb[0].mxu0
  %1613 = vmatprep.mubr.f32.mxu0 0.0
  %1614 = vmatmul.mubr.f32.gmra.mrb[0].mxu0 %v1306
  %v1615 = vpop.f32.mrb[0].mxu0
  %v1616 = vadd.f32 0.0, %v1615
  %v1617 = vpop.f32.mrb[0].mxu0
  %1618 = vmatprep.mubr.f32.mxu0 0.0
  %1619 = vmatmul.mubr.f32.gmra.mrb[0].mxu0 %v1309
  %v1620 = vpop.f32.mrb[0].mxu0
  %v1621 = vadd.f32 0.0, %v1620
  %v1622 = vpop.f32.mrb[0].mxu0
  %1623 = vmatprep.mubr.f32.mxu0 0.0
  %1624 = vmatmul.mubr.f32.gmra.mrb[0].mxu0 %v1312
  %v1625 = vpop.f32.mrb[0].mxu0
  %v1626 = vadd.f32 0.0, %v1625
  %v1627 = vpop.f32.mrb[0].mxu0
  %1628 = vdwg.mxu0
  %v1629 = vmul.f32 %v1591, %v1419
  %v1630 = vmul.f32 %v1596, %v1419
  %v1631 = vmul.f32 %v1601, %v1419
  %v1632 = vmul.f32 %v1606, %v1419
  %v1633 = vmul.f32 %v1611, %v1419
  %v1634 = vmul.f32 %v1616, %v1419
  %v1635 = vmul.f32 %v1621, %v1419
  %v1636 = vmul.f32 %v1626, %v1419
  %v1637 = vadd.f32 %v1629, 1e-05
  %v1638 = vadd.f32 %v1630, 1e-05
  %v1639 = vadd.f32 %v1631, 1e-05
  %v1640 = vadd.f32 %v1632, 1e-05
  %v1641 = vadd.f32 %v1633, 1e-05
  %v1642 = vadd.f32 %v1634, 1e-05
  %v1643 = vadd.f32 %v1635, 1e-05
  %v1644 = vadd.f32 %v1636, 1e-05
  %v1645 = vrsqrt.pop %v1637
  %v1646 = vrsqrt.pop %v1638
  %v1647 = vrsqrt.pop %v1639
  %v1648 = vrsqrt.pop %v1640
  %v1649 = vrsqrt.pop %v1641
  %v1650 = vrsqrt.pop %v1642
  %v1651 = vrsqrt.pop %v1643
  %v1652 = vrsqrt.pop %v1644
  %1654 = vset.pattern.permute.xlu0 0
  %1655 = vperm.xlu0 %1654, %v1645
  %v1656 = vpop.permute.xlu0 %1655
  %1659 = vset.pattern.permute.xlu0 0
  %1660 = vperm.xlu0 %1659, %v1646
  %v1661 = vpop.permute.xlu0 %1660
  %1664 = vset.pattern.permute.xlu0 0
  %1665 = vperm.xlu0 %1664, %v1647
  %v1666 = vpop.permute.xlu0 %1665
  %1669 = vset.pattern.permute.xlu0 0
  %1670 = vperm.xlu0 %1669, %v1648
  %v1671 = vpop.permute.xlu0 %1670
  %1674 = vset.pattern.permute.xlu0 0
  %1675 = vperm.xlu0 %1674, %v1649
  %v1676 = vpop.permute.xlu0 %1675
  %1679 = vset.pattern.permute.xlu0 0
  %1680 = vperm.xlu0 %1679, %v1650
  %v1681 = vpop.permute.xlu0 %1680
  %1684 = vset.pattern.permute.xlu0 0
  %1685 = vperm.xlu0 %1684, %v1651
  %v1686 = vpop.permute.xlu0 %1685
  %1689 = vset.pattern.permute.xlu0 0
  %1690 = vperm.xlu0 %1689, %v1652
  %v1691 = vpop.permute.xlu0 %1690
  %v1693 = vmul.f32 %v1468, %v1656
  %v1694 = vmul.f32 %v1469, %v1656
  %v1695 = vmul.f32 %v1470, %v1661
  %v1696 = vmul.f32 %v1471, %v1661
  %v1697 = vmul.f32 %v1472, %v1666
  %v1698 = vmul.f32 %v1473, %v1666
  %v1699 = vmul.f32 %v1474, %v1671
  %v1700 = vmul.f32 %v1475, %v1671
  %v1701 = vmul.f32 %v1476, %v1676
  %v1702 = vmul.f32 %v1477, %v1676
  %v1703 = vmul.f32 %v1478, %v1681
  %v1704 = vmul.f32 %v1479, %v1681
  %v1705 = vmul.f32 %v1480, %v1686
  %v1706 = vmul.f32 %v1481, %v1686
  %v1707 = vmul.f32 %v1482, %v1691
  %v1708 = vmul.f32 %v1483, %v1691
  %1710 = vset.pattern.permute.xlu0 0
  %1711 = vperm.xlu0 %1710, %v684
  %v1712 = vpop.permute.xlu0 %1711
  %1715 = vset.pattern.permute.xlu0 0
  %1716 = vperm.xlu0 %1715, %v685
  %v1717 = vpop.permute.xlu0 %1716
  %1720 = vset.pattern.permute.xlu0 0
  %1721 = vperm.xlu0 %1720, %v686
  %v1722 = vpop.permute.xlu0 %1721
  %1725 = vset.pattern.permute.xlu0 0
  %1726 = vperm.xlu0 %1725, %v687
  %v1727 = vpop.permute.xlu0 %1726
  %1730 = vset.pattern.permute.xlu0 0
  %1731 = vperm.xlu0 %1730, %v688
  %v1732 = vpop.permute.xlu0 %1731
  %1735 = vset.pattern.permute.xlu0 0
  %1736 = vperm.xlu0 %1735, %v689
  %v1737 = vpop.permute.xlu0 %1736
  %1740 = vset.pattern.permute.xlu0 0
  %1741 = vperm.xlu0 %1740, %v690
  %v1742 = vpop.permute.xlu0 %1741
  %1745 = vset.pattern.permute.xlu0 0
  %1746 = vperm.xlu0 %1745, %v691
  %v1747 = vpop.permute.xlu0 %1746
  %v1749 = vmul.f32 %v1693, %v1712
  %v1750 = vmul.f32 %v1694, %v1712
  %v1751 = vmul.f32 %v1695, %v1717
  %v1752 = vmul.f32 %v1696, %v1717
  %v1753 = vmul.f32 %v1697, %v1722
  %v1754 = vmul.f32 %v1698, %v1722
  %v1755 = vmul.f32 %v1699, %v1727
  %v1756 = vmul.f32 %v1700, %v1727
  %v1757 = vmul.f32 %v1701, %v1732
  %v1758 = vmul.f32 %v1702, %v1732
  %v1759 = vmul.f32 %v1703, %v1737
  %v1760 = vmul.f32 %v1704, %v1737
  %v1761 = vmul.f32 %v1705, %v1742
  %v1762 = vmul.f32 %v1706, %v1742
  %v1763 = vmul.f32 %v1707, %v1747
  %v1764 = vmul.f32 %v1708, %v1747
  %1766 = vset.pattern.permute.xlu0 0
  %1767 = vperm.xlu0 %1766, %v692
  %v1768 = vpop.permute.xlu0 %1767
  %1771 = vset.pattern.permute.xlu0 0
  %1772 = vperm.xlu0 %1771, %v693
  %v1773 = vpop.permute.xlu0 %1772
  %1776 = vset.pattern.permute.xlu0 0
  %1777 = vperm.xlu0 %1776, %v694
  %v1778 = vpop.permute.xlu0 %1777
  %1781 = vset.pattern.permute.xlu0 0
  %1782 = vperm.xlu0 %1781, %v695
  %v1783 = vpop.permute.xlu0 %1782
  %1786 = vset.pattern.permute.xlu0 0
  %1787 = vperm.xlu0 %1786, %v696
  %v1788 = vpop.permute.xlu0 %1787
  %1791 = vset.pattern.permute.xlu0 0
  %1792 = vperm.xlu0 %1791, %v697
  %v1793 = vpop.permute.xlu0 %1792
  %1796 = vset.pattern.permute.xlu0 0
  %1797 = vperm.xlu0 %1796, %v698
  %v1798 = vpop.permute.xlu0 %1797
  %1801 = vset.pattern.permute.xlu0 0
  %1802 = vperm.xlu0 %1801, %v699
  %v1803 = vpop.permute.xlu0 %1802
  %v1805 = vadd.f32 %v1749, %v1768
  %v1806 = vadd.f32 %v1750, %v1768
  %v1807 = vadd.f32 %v1751, %v1773
  %v1808 = vadd.f32 %v1752, %v1773
  %v1809 = vadd.f32 %v1753, %v1778
  %v1810 = vadd.f32 %v1754, %v1778
  %v1811 = vadd.f32 %v1755, %v1783
  %v1812 = vadd.f32 %v1756, %v1783
  %v1813 = vadd.f32 %v1757, %v1788
  %v1814 = vadd.f32 %v1758, %v1788
  %v1815 = vadd.f32 %v1759, %v1793
  %v1816 = vadd.f32 %v1760, %v1793
  %v1817 = vadd.f32 %v1761, %v1798
  %v1818 = vadd.f32 %v1762, %v1798
  %v1819 = vadd.f32 %v1763, %v1803
  %v1820 = vadd.f32 %v1764, %v1803
  %1821 = vst [vmem:[%s20] sm:$0xff] %v1805
  %1822 = vst [vmem:[%s20 + $0x8] sm:$0xff] %v1806
  %1823 = vst [vmem:[%s20 + $0x10] sm:$0xff] %v1807
  %1824 = vst [vmem:[%s20 + $0x18] sm:$0xff] %v1808
  %1825 = vst [vmem:[%s20 + $0x20] sm:$0xff] %v1809
  %1826 = vst [vmem:[%s20 + $0x28] sm:$0xff] %v1810
  %1827 = vst [vmem:[%s20 + $0x30] sm:$0xff] %v1811
  %1828 = vst [vmem:[%s20 + $0x38] sm:$0xff] %v1812
  %1829 = vst [vmem:[%s20 + $0x40] sm:$0xff] %v1813
  %1830 = vst [vmem:[%s20 + $0x48] sm:$0xff] %v1814
  %1831 = vst [vmem:[%s20 + $0x50] sm:$0xff] %v1815
  %1832 = vst [vmem:[%s20 + $0x58] sm:$0xff] %v1816
  %1833 = vst [vmem:[%s20 + $0x60] sm:$0xff] %v1817
  %1834 = vst [vmem:[%s20 + $0x68] sm:$0xff] %v1818
  %1835 = vst [vmem:[%s20 + $0x70] sm:$0xff] %v1819
  %1836 = vst [vmem:[%s20 + $0x78] sm:$0xff] %v1820
  %s1837 = scalar_lea.vmem %s0, 128
  %v1838 = vld [vmem:[%s1837] sm:$0xff]
  %v1839 = vld [vmem:[%s1837 + $0x8] sm:$0xff]
  %v1840 = vld [vmem:[%s1837 + $0x10] sm:$0xff]
  %v1841 = vld [vmem:[%s1837 + $0x18] sm:$0xff]
  %v1842 = vld [vmem:[%s1837 + $0x20] sm:$0xff]
  %v1843 = vld [vmem:[%s1837 + $0x28] sm:$0xff]
  %v1844 = vld [vmem:[%s1837 + $0x30] sm:$0xff]
  %v1845 = vld [vmem:[%s1837 + $0x38] sm:$0xff]
  %v1846 = vld [vmem:[%s1837 + $0x40] sm:$0xff]
  %v1847 = vld [vmem:[%s1837 + $0x48] sm:$0xff]
  %v1848 = vld [vmem:[%s1837 + $0x50] sm:$0xff]
  %v1849 = vld [vmem:[%s1837 + $0x58] sm:$0xff]
  %v1850 = vld [vmem:[%s1837 + $0x60] sm:$0xff]
  %v1851 = vld [vmem:[%s1837 + $0x68] sm:$0xff]
  %v1852 = vld [vmem:[%s1837 + $0x70] sm:$0xff]
  %v1853 = vld [vmem:[%s1837 + $0x78] sm:$0xff]
  %v1855 = vsel %vm730, %v1838, 0
  %v1858 = vsel %vm730, %v1839, 0
  %v1861 = vsel %vm730, %v1840, 0
  %v1864 = vsel %vm730, %v1841, 0
  %v1867 = vsel %vm730, %v1842, 0
  %v1870 = vsel %vm730, %v1843, 0
  %v1873 = vsel %vm730, %v1844, 0
  %v1876 = vsel %vm730, %v1845, 0
  %v1879 = vsel %vm730, %v1846, 0
  %v1882 = vsel %vm730, %v1847, 0
  %v1885 = vsel %vm730, %v1848, 0
  %v1888 = vsel %vm730, %v1849, 0
  %v1891 = vsel %vm730, %v1850, 0
  %v1894 = vsel %vm730, %v1851, 0
  %v1897 = vsel %vm730, %v1852, 0
  %v1900 = vsel %vm730, %v1853, 0
  %1902 = vmatprep.subr.mxu0 0.0
  %1903 = vmatpush1.msra.mxu0 %v663
  %1904 = vmatprep.subr.mxu0 0.0
  %1905 = vmatpush1.msra.mxu0 %v664
  %1906 = vmatprep.subr.mxu0 0.0
  %1907 = vmatpush1.msra.mxu0 %v665
  %1908 = vmatprep.subr.mxu0 0.0
  %1909 = vmatpush1.msra.mxu0 %v666
  %1910 = vmatprep.subr.mxu0 0.0
  %1911 = vmatpush1.msra.mxu0 0.0
  %1912 = vmatprep.subr.mxu0 0.0
  %1913 = vmatpush1.msra.mxu0 0.0
  %1914 = vmatprep.subr.mxu0 0.0
  %1915 = vmatpush1.msra.mxu0 0.0
  %1916 = vmatprep.subr.mxu0 0.0
  %1917 = vmatpush1.msra.mxu0 0.0
  %1918 = vmatprep.subr.mxu0 0.0
  %1919 = vmatpush1.msra.mxu0 0.0
  %1920 = vmatprep.subr.mxu0 0.0
  %1921 = vmatpush1.msra.mxu0 0.0
  %1922 = vmatprep.subr.mxu0 0.0
  %1923 = vmatpush1.msra.mxu0 0.0
  %1924 = vmatprep.subr.mxu0 0.0
  %1925 = vmatpush1.msra.mxu0 0.0
  %1926 = vmatprep.subr.mxu0 0.0
  %1927 = vmatpush1.msra.mxu0 0.0
  %1928 = vmatprep.subr.mxu0 0.0
  %1929 = vmatpush1.msra.mxu0 0.0
  %1930 = vmatprep.subr.mxu0 0.0
  %1931 = vmatpush1.msra.mxu0 0.0
  %1932 = vmatprep.subr.mxu0 0.0
  %1933 = vmatpush1.msra.mxu0 0.0
  %1934 = vmatprep.subr.mxu0 0.0
  %1935 = vmatpush1.msra.mxu0 0.0
  %1936 = vmatprep.subr.mxu0 0.0
  %1937 = vmatpush1.msra.mxu0 0.0
  %1938 = vmatprep.subr.mxu0 0.0
  %1939 = vmatpush1.msra.mxu0 0.0
  %1940 = vmatprep.subr.mxu0 0.0
  %1941 = vmatpush1.msra.mxu0 0.0
  %1942 = vmatprep.subr.mxu0 0.0
  %1943 = vmatpush1.msra.mxu0 0.0
  %1944 = vmatprep.subr.mxu0 0.0
  %1945 = vmatpush1.msra.mxu0 0.0
  %1946 = vmatprep.subr.mxu0 0.0
  %1947 = vmatpush1.msra.mxu0 0.0
  %1948 = vmatprep.subr.mxu0 0.0
  %1949 = vmatpush1.msra.mxu0 0.0
  %1950 = vmatprep.subr.mxu0 0.0
  %1951 = vmatpush1.msra.mxu0 0.0
  %1952 = vmatprep.subr.mxu0 0.0
  %1953 = vmatpush1.msra.mxu0 0.0
  %1954 = vmatprep.subr.mxu0 0.0
  %1955 = vmatpush1.msra.mxu0 0.0
  %1956 = vmatprep.subr.mxu0 0.0
  %1957 = vmatpush1.msra.mxu0 0.0
  %1958 = vmatprep.subr.mxu0 0.0
  %1959 = vmatpush1.msra.mxu0 0.0
  %1960 = vmatprep.subr.mxu0 0.0
  %1961 = vmatpush1.msra.mxu0 0.0
  %1962 = vmatprep.subr.mxu0 0.0
  %1963 = vmatpush1.msra.mxu0 0.0
  %1964 = vmatprep.subr.mxu0 0.0
  %1965 = vmatpush1.msra.mxu0 0.0
  %1966 = vmatprep.mubr.f32.mxu0 0.0
  %1967 = vmatmul.mubr.f32.gmra.mrb[0].mxu0 %v1855
  %v1968 = vpop.f32.mrb[0].mxu0
  %v1969 = vadd.f32 %v728, %v1968
  %v1970 = vpop.f32.mrb[0].mxu0
  %1971 = vmatprep.mubr.f32.mxu0 0.0
  %1972 = vmatmul.mubr.f32.gmra.mrb[0].mxu0 %v1858
  %v1973 = vpop.f32.mrb[0].mxu0
  %v1974 = vadd.f32 %v728, %v1973
  %v1975 = vpop.f32.mrb[0].mxu0
  %1976 = vmatprep.mubr.f32.mxu0 0.0
  %1977 = vmatmul.mubr.f32.gmra.mrb[0].mxu0 %v1861
  %v1978 = vpop.f32.mrb[0].mxu0
  %v1979 = vadd.f32 %v728, %v1978
  %v1980 = vpop.f32.mrb[0].mxu0
  %1981 = vmatprep.mubr.f32.mxu0 0.0
  %1982 = vmatmul.mubr.f32.gmra.mrb[0].mxu0 %v1864
  %v1983 = vpop.f32.mrb[0].mxu0
  %v1984 = vadd.f32 %v728, %v1983
  %v1985 = vpop.f32.mrb[0].mxu0
  %1986 = vmatprep.mubr.f32.mxu0 0.0
  %1987 = vmatmul.mubr.f32.gmra.mrb[0].mxu0 %v1867
  %v1988 = vpop.f32.mrb[0].mxu0
  %v1989 = vadd.f32 %v728, %v1988
  %v1990 = vpop.f32.mrb[0].mxu0
  %1991 = vmatprep.mubr.f32.mxu0 0.0
  %1992 = vmatmul.mubr.f32.gmra.mrb[0].mxu0 %v1870
  %v1993 = vpop.f32.mrb[0].mxu0
  %v1994 = vadd.f32 %v728, %v1993
  %v1995 = vpop.f32.mrb[0].mxu0
  %1996 = vmatprep.mubr.f32.mxu0 0.0
  %1997 = vmatmul.mubr.f32.gmra.mrb[0].mxu0 %v1873
  %v1998 = vpop.f32.mrb[0].mxu0
  %v1999 = vadd.f32 %v728, %v1998
  %v2000 = vpop.f32.mrb[0].mxu0
  %2001 = vmatprep.mubr.f32.mxu0 0.0
  %2002 = vmatmul.mubr.f32.gmra.mrb[0].mxu0 %v1876
  %v2003 = vpop.f32.mrb[0].mxu0
  %v2004 = vadd.f32 %v728, %v2003
  %v2005 = vpop.f32.mrb[0].mxu0
  %2006 = vmatprep.mubr.f32.mxu0 0.0
  %2007 = vmatmul.mubr.f32.gmra.mrb[0].mxu0 %v1879
  %v2008 = vpop.f32.mrb[0].mxu0
  %v2009 = vadd.f32 %v728, %v2008
  %v2010 = vpop.f32.mrb[0].mxu0
  %2011 = vmatprep.mubr.f32.mxu0 0.0
  %2012 = vmatmul.mubr.f32.gmra.mrb[0].mxu0 %v1882
  %v2013 = vpop.f32.mrb[0].mxu0
  %v2014 = vadd.f32 %v728, %v2013
  %v2015 = vpop.f32.mrb[0].mxu0
  %2016 = vmatprep.mubr.f32.mxu0 0.0
  %2017 = vmatmul.mubr.f32.gmra.mrb[0].mxu0 %v1885
  %v2018 = vpop.f32.mrb[0].mxu0
  %v2019 = vadd.f32 %v728, %v2018
  %v2020 = vpop.f32.mrb[0].mxu0
  %2021 = vmatprep.mubr.f32.mxu0 0.0
  %2022 = vmatmul.mubr.f32.gmra.mrb[0].mxu0 %v1888
  %v2023 = vpop.f32.mrb[0].mxu0
  %v2024 = vadd.f32 %v728, %v2023
  %v2025 = vpop.f32.mrb[0].mxu0
  %2026 = vmatprep.mubr.f32.mxu0 0.0
  %2027 = vmatmul.mubr.f32.gmra.mrb[0].mxu0 %v1891
  %v2028 = vpop.f32.mrb[0].mxu0
  %v2029 = vadd.f32 %v728, %v2028
  %v2030 = vpop.f32.mrb[0].mxu0
  %2031 = vmatprep.mubr.f32.mxu0 0.0
  %2032 = vmatmul.mubr.f32.gmra.mrb[0].mxu0 %v1894
  %v2033 = vpop.f32.mrb[0].mxu0
  %v2034 = vadd.f32 %v728, %v2033
  %v2035 = vpop.f32.mrb[0].mxu0
  %2036 = vmatprep.mubr.f32.mxu0 0.0
  %2037 = vmatmul.mubr.f32.gmra.mrb[0].mxu0 %v1897
  %v2038 = vpop.f32.mrb[0].mxu0
  %v2039 = vadd.f32 %v728, %v2038
  %v2040 = vpop.f32.mrb[0].mxu0
  %2041 = vmatprep.mubr.f32.mxu0 0.0
  %2042 = vmatmul.mubr.f32.gmra.mrb[0].mxu0 %v1900
  %v2043 = vpop.f32.mrb[0].mxu0
  %v2044 = vadd.f32 %v728, %v2043
  %v2045 = vpop.f32.mrb[0].mxu0
  %2046 = vdwg.mxu0
  %s2047 = scalar_lea.vmem %s3, 32
  %v2048 = vld [vmem:[%s2047] sm:$0xff]
  %v2049 = vld [vmem:[%s2047 + $0x8] sm:$0xff]
  %v2050 = vld [vmem:[%s2047 + $0x10] sm:$0xff]
  %v2051 = vld [vmem:[%s2047 + $0x18] sm:$0xff]
  %s2052 = scalar_lea.vmem %s11, 1
  %v2053 = vld [vmem:[%s2052] sm:$0x1]
  %v2055 = vlaneseq
  %v2056 = vshrl.u32 %v2055, 7
  %v2057 = vsub.s32 0, %v2056
  %v2058 = vrot.slane %v2053, %v2057
  %v2061 = vsel %vm85, %v2048, 0
  %v2064 = vsel %vm85, %v2049, 0
  %v2067 = vsel %vm85, %v2050, 0
  %v2070 = vsel %vm85, %v2051, 0
  %v2073 = vsel %vm85, %v1969, 0
  %v2076 = vsel %vm85, %v1974, 0
  %v2079 = vsel %vm85, %v1979, 0
  %v2082 = vsel %vm85, %v1984, 0
  %v2085 = vsel %vm85, %v1989, 0
  %v2088 = vsel %vm85, %v1994, 0
  %v2091 = vsel %vm85, %v1999, 0
  %v2094 = vsel %vm85, %v2004, 0
  %v2097 = vsel %vm85, %v2009, 0
  %v2100 = vsel %vm85, %v2014, 0
  %v2103 = vsel %vm85, %v2019, 0
  %v2106 = vsel %vm85, %v2024, 0
  %v2109 = vsel %vm85, %v2029, 0
  %v2112 = vsel %vm85, %v2034, 0
  %v2115 = vsel %vm85, %v2039, 0
  %v2118 = vsel %vm85, %v2044, 0
  %2120 = vmatprep.subr.mxu0 0.0
  %2121 = vmatpush1.xpose.msra.mxu0 %v2073
  %2122 = vmatprep.subr.mxu0 0.0
  %2123 = vmatpush1.xpose.msra.mxu0 %v2076
  %2124 = vmatprep.subr.mxu0 0.0
  %2125 = vmatpush1.xpose.msra.mxu0 %v2079
  %2126 = vmatprep.subr.mxu0 0.0
  %2127 = vmatpush1.xpose.msra.mxu0 %v2082
  %2128 = vmatprep.subr.mxu0 0.0
  %2129 = vmatpush1.xpose.msra.mxu0 %v2085
  %2130 = vmatprep.subr.mxu0 0.0
  %2131 = vmatpush1.xpose.msra.mxu0 %v2088
  %2132 = vmatprep.subr.mxu0 0.0
  %2133 = vmatpush1.xpose.msra.mxu0 %v2091
  %2134 = vmatprep.subr.mxu0 0.0
  %2135 = vmatpush1.xpose.msra.mxu0 %v2094
  %2136 = vmatprep.subr.mxu0 0.0
  %2137 = vmatpush1.xpose.msra.mxu0 %v2097
  %2138 = vmatprep.subr.mxu0 0.0
  %2139 = vmatpush1.xpose.msra.mxu0 %v2100
  %2140 = vmatprep.subr.mxu0 0.0
  %2141 = vmatpush1.xpose.msra.mxu0 %v2103
  %2142 = vmatprep.subr.mxu0 0.0
  %2143 = vmatpush1.xpose.msra.mxu0 %v2106
  %2144 = vmatprep.subr.mxu0 0.0
  %2145 = vmatpush1.xpose.msra.mxu0 %v2109
  %2146 = vmatprep.subr.mxu0 0.0
  %2147 = vmatpush1.xpose.msra.mxu0 %v2112
  %2148 = vmatprep.subr.mxu0 0.0
  %2149 = vmatpush1.xpose.msra.mxu0 %v2115
  %2150 = vmatprep.subr.mxu0 0.0
  %2151 = vmatpush1.xpose.msra.mxu0 %v2118
  %2152 = vmatprep.subr.mxu0 0.0
  %2153 = vmatpush1.xpose.msra.mxu0 0.0
  %2154 = vmatprep.subr.mxu0 0.0
  %2155 = vmatpush1.xpose.msra.mxu0 0.0
  %2156 = vmatprep.subr.mxu0 0.0
  %2157 = vmatpush1.xpose.msra.mxu0 0.0
  %2158 = vmatprep.subr.mxu0 0.0
  %2159 = vmatpush1.xpose.msra.mxu0 0.0
  %2160 = vmatprep.subr.mxu0 0.0
  %2161 = vmatpush1.xpose.msra.mxu0 0.0
  %2162 = vmatprep.subr.mxu0 0.0
  %2163 = vmatpush1.xpose.msra.mxu0 0.0
  %2164 = vmatprep.subr.mxu0 0.0
  %2165 = vmatpush1.xpose.msra.mxu0 0.0
  %2166 = vmatprep.subr.mxu0 0.0
  %2167 = vmatpush1.xpose.msra.mxu0 0.0
  %2168 = vmatprep.subr.mxu0 0.0
  %2169 = vmatpush1.xpose.msra.mxu0 0.0
  %2170 = vmatprep.subr.mxu0 0.0
  %2171 = vmatpush1.xpose.msra.mxu0 0.0
  %2172 = vmatprep.subr.mxu0 0.0
  %2173 = vmatpush1.xpose.msra.mxu0 0.0
  %2174 = vmatprep.subr.mxu0 0.0
  %2175 = vmatpush1.xpose.msra.mxu0 0.0
  %2176 = vmatprep.subr.mxu0 0.0
  %2177 = vmatpush1.xpose.msra.mxu0 0.0
  %2178 = vmatprep.subr.mxu0 0.0
  %2179 = vmatpush1.xpose.msra.mxu0 0.0
  %2180 = vmatprep.subr.mxu0 0.0
  %2181 = vmatpush1.xpose.msra.mxu0 0.0
  %2182 = vmatprep.subr.mxu0 0.0
  %2183 = vmatpush1.xpose.msra.mxu0 0.0
  %2184 = vmatprep.mubr.f32.mxu0 0.0
  %2185 = vmatmul.mubr.f32.gmra.mrb[0].mxu0 %v2061
  %v2186 = vpop.f32.mrb[0].mxu0
  %v2187 = vadd.f32 %v2058, %v2186
  %v2188 = vpop.f32.mrb[0].mxu0
  %2189 = vmatprep.mubr.f32.mxu0 0.0
  %2190 = vmatmul.mubr.f32.gmra.mrb[0].mxu0 %v2064
  %v2191 = vpop.f32.mrb[0].mxu0
  %v2192 = vadd.f32 %v2058, %v2191
  %v2193 = vpop.f32.mrb[0].mxu0
  %2194 = vmatprep.mubr.f32.mxu0 0.0
  %2195 = vmatmul.mubr.f32.gmra.mrb[0].mxu0 %v2067
  %v2196 = vpop.f32.mrb[0].mxu0
  %v2197 = vadd.f32 %v2058, %v2196
  %v2198 = vpop.f32.mrb[0].mxu0
  %2199 = vmatprep.mubr.f32.mxu0 0.0
  %2200 = vmatmul.mubr.f32.gmra.mrb[0].mxu0 %v2070
  %v2201 = vpop.f32.mrb[0].mxu0
  %v2202 = vadd.f32 %v2058, %v2201
  %v2203 = vpop.f32.mrb[0].mxu0
  %2204 = vdwg.mxu0
  %s2205 = scalar_lea.vmem %s18, 32
  %2206 = vst [vmem:[%s2205] sm:$0xff] %v2187
  %2207 = vst [vmem:[%s2205 + $0x8] sm:$0xff] %v2192
  %2208 = vst [vmem:[%s2205 + $0x10] sm:$0xff] %v2197
  %2209 = vst [vmem:[%s2205 + $0x18] sm:$0xff] %v2202
  %s2210 = scalar_lea.vmem %s12, 32
  %v2211 = vld [vmem:[%s2210] sm:$0xff]
  %v2212 = vld [vmem:[%s2210 + $0x8] sm:$0xff]
  %v2213 = vld [vmem:[%s2210 + $0x10] sm:$0xff]
  %v2214 = vld [vmem:[%s2210 + $0x18] sm:$0xff]
  %2215 = vmatprep.subr.mxu0 %v2212
  %2216 = vmatpush1.msra.mxu0 %v2211
  %2217 = vmatprep.subr.mxu0 %v2214
  %2218 = vmatpush1.msra.mxu0 %v2213
  %2219 = vmatprep.subr.mxu0 0.0
  %2220 = vmatpush1.msra.mxu0 0.0
  %2221 = vmatprep.subr.mxu0 0.0
  %2222 = vmatpush1.msra.mxu0 0.0
  %2223 = vmatprep.subr.mxu0 0.0
  %2224 = vmatpush1.msra.mxu0 0.0
  %2225 = vmatprep.subr.mxu0 0.0
  %2226 = vmatpush1.msra.mxu0 0.0
  %2227 = vmatprep.subr.mxu0 0.0
  %2228 = vmatpush1.msra.mxu0 0.0
  %2229 = vmatprep.subr.mxu0 0.0
  %2230 = vmatpush1.msra.mxu0 0.0
  %2231 = vmatprep.subr.mxu0 0.0
  %2232 = vmatpush1.msra.mxu0 0.0
  %2233 = vmatprep.subr.mxu0 0.0
  %2234 = vmatpush1.msra.mxu0 0.0
  %2235 = vmatprep.subr.mxu0 0.0
  %2236 = vmatpush1.msra.mxu0 0.0
  %2237 = vmatprep.subr.mxu0 0.0
  %2238 = vmatpush1.msra.mxu0 0.0
  %2239 = vmatprep.subr.mxu0 0.0
  %2240 = vmatpush1.msra.mxu0 0.0
  %2241 = vmatprep.subr.mxu0 0.0
  %2242 = vmatpush1.msra.mxu0 0.0
  %2243 = vmatprep.subr.mxu0 0.0
  %2244 = vmatpush1.msra.mxu0 0.0
  %2245 = vmatprep.subr.mxu0 0.0
  %2246 = vmatpush1.msra.mxu0 0.0
  %2247 = vmatprep.subr.mxu0 0.0
  %2248 = vmatpush1.msra.mxu0 0.0
  %2249 = vmatprep.subr.mxu0 0.0
  %2250 = vmatpush1.msra.mxu0 0.0
  %2251 = vmatprep.subr.mxu0 0.0
  %2252 = vmatpush1.msra.mxu0 0.0
  %2253 = vmatprep.subr.mxu0 0.0
  %2254 = vmatpush1.msra.mxu0 0.0
  %2255 = vmatprep.subr.mxu0 0.0
  %2256 = vmatpush1.msra.mxu0 0.0
  %2257 = vmatprep.subr.mxu0 0.0
  %2258 = vmatpush1.msra.mxu0 0.0
  %2259 = vmatprep.subr.mxu0 0.0
  %2260 = vmatpush1.msra.mxu0 0.0
  %2261 = vmatprep.subr.mxu0 0.0
  %2262 = vmatpush1.msra.mxu0 0.0
  %2263 = vmatprep.subr.mxu0 0.0
  %2264 = vmatpush1.msra.mxu0 0.0
  %2265 = vmatprep.subr.mxu0 0.0
  %2266 = vmatpush1.msra.mxu0 0.0
  %2267 = vmatprep.subr.mxu0 0.0
  %2268 = vmatpush1.msra.mxu0 0.0
  %2269 = vmatprep.subr.mxu0 0.0
  %2270 = vmatpush1.msra.mxu0 0.0
  %2271 = vmatprep.subr.mxu0 0.0
  %2272 = vmatpush1.msra.mxu0 0.0
  %2273 = vmatprep.subr.mxu0 0.0
  %2274 = vmatpush1.msra.mxu0 0.0
  %2275 = vmatprep.subr.mxu0 0.0
  %2276 = vmatpush1.msra.mxu0 0.0
  %2277 = vmatprep.subr.mxu0 0.0
  %2278 = vmatpush1.msra.mxu0 0.0
  %2279 = vmatprep.mubr.f32.mxu0 0.0
  %2280 = vmatmul.mubr.f32.gmra.mrb[0].mxu0 %v1130
  %v2281 = vpop.f32.mrb[0].mxu0
  %v2282 = vadd.f32 %v1091, %v2281
  %v2283 = vpop.f32.mrb[0].mxu0
  %v2284 = vadd.f32 %v1091, %v2283
  %2285 = vmatprep.mubr.f32.mxu0 0.0
  %2286 = vmatmul.mubr.f32.gmra.mrb[0].mxu0 %v1133
  %v2287 = vpop.f32.mrb[0].mxu0
  %v2288 = vadd.f32 %v1096, %v2287
  %v2289 = vpop.f32.mrb[0].mxu0
  %v2290 = vadd.f32 %v1096, %v2289
  %2291 = vmatprep.mubr.f32.mxu0 0.0
  %2292 = vmatmul.mubr.f32.gmra.mrb[0].mxu0 %v1136
  %v2293 = vpop.f32.mrb[0].mxu0
  %v2294 = vadd.f32 %v1101, %v2293
  %v2295 = vpop.f32.mrb[0].mxu0
  %v2296 = vadd.f32 %v1101, %v2295
  %2297 = vmatprep.mubr.f32.mxu0 0.0
  %2298 = vmatmul.mubr.f32.gmra.mrb[0].mxu0 %v1139
  %v2299 = vpop.f32.mrb[0].mxu0
  %v2300 = vadd.f32 %v1106, %v2299
  %v2301 = vpop.f32.mrb[0].mxu0
  %v2302 = vadd.f32 %v1106, %v2301
  %2303 = vmatprep.mubr.f32.mxu0 0.0
  %2304 = vmatmul.mubr.f32.gmra.mrb[0].mxu0 %v1142
  %v2305 = vpop.f32.mrb[0].mxu0
  %v2306 = vadd.f32 %v1111, %v2305
  %v2307 = vpop.f32.mrb[0].mxu0
  %v2308 = vadd.f32 %v1111, %v2307
  %2309 = vmatprep.mubr.f32.mxu0 0.0
  %2310 = vmatmul.mubr.f32.gmra.mrb[0].mxu0 %v1145
  %v2311 = vpop.f32.mrb[0].mxu0
  %v2312 = vadd.f32 %v1116, %v2311
  %v2313 = vpop.f32.mrb[0].mxu0
  %v2314 = vadd.f32 %v1116, %v2313
  %2315 = vmatprep.mubr.f32.mxu0 0.0
  %2316 = vmatmul.mubr.f32.gmra.mrb[0].mxu0 %v1148
  %v2317 = vpop.f32.mrb[0].mxu0
  %v2318 = vadd.f32 %v1121, %v2317
  %v2319 = vpop.f32.mrb[0].mxu0
  %v2320 = vadd.f32 %v1121, %v2319
  %2321 = vmatprep.mubr.f32.mxu0 0.0
  %2322 = vmatmul.mubr.f32.gmra.mrb[0].mxu0 %v1151
  %v2323 = vpop.f32.mrb[0].mxu0
  %v2324 = vadd.f32 %v1126, %v2323
  %v2325 = vpop.f32.mrb[0].mxu0
  %v2326 = vadd.f32 %v1126, %v2325
  %2327 = vdwg.mxu0
  %v2328 = vadd.f32 %v2282, %v2284
  %2329 = vadd.xlane.f32.xlu0 %v2328
  %v2330 = vpop.xlane.xlu0 %2329
  %v2331 = vadd.f32 %v2288, %v2290
  %2332 = vadd.xlane.f32.xlu0 %v2331
  %v2333 = vpop.xlane.xlu0 %2332
  %v2334 = vadd.f32 %v2294, %v2296
  %2335 = vadd.xlane.f32.xlu0 %v2334
  %v2336 = vpop.xlane.xlu0 %2335
  %v2337 = vadd.f32 %v2300, %v2302
  %2338 = vadd.xlane.f32.xlu0 %v2337
  %v2339 = vpop.xlane.xlu0 %2338
  %v2340 = vadd.f32 %v2306, %v2308
  %2341 = vadd.xlane.f32.xlu0 %v2340
  %v2342 = vpop.xlane.xlu0 %2341
  %v2343 = vadd.f32 %v2312, %v2314
  %2344 = vadd.xlane.f32.xlu0 %v2343
  %v2345 = vpop.xlane.xlu0 %2344
  %v2346 = vadd.f32 %v2318, %v2320
  %2347 = vadd.xlane.f32.xlu0 %v2346
  %v2348 = vpop.xlane.xlu0 %2347
  %v2349 = vadd.f32 %v2324, %v2326
  %2350 = vadd.xlane.f32.xlu0 %v2349
  %v2351 = vpop.xlane.xlu0 %2350
  %2352 = vmatprep.subr.mxu0 0.0
  %2353 = vmatpush1.msra.mxu0 %v2330
  %2354 = vmatprep.subr.mxu0 0.0
  %2355 = vmatpush1.msra.mxu0 %v2333
  %2356 = vmatprep.subr.mxu0 0.0
  %2357 = vmatpush1.msra.mxu0 %v2336
  %2358 = vmatprep.subr.mxu0 0.0
  %2359 = vmatpush1.msra.mxu0 %v2339
  %2360 = vmatprep.subr.mxu0 0.0
  %2361 = vmatpush1.msra.mxu0 %v2342
  %2362 = vmatprep.subr.mxu0 0.0
  %2363 = vmatpush1.msra.mxu0 %v2345
  %2364 = vmatprep.subr.mxu0 0.0
  %2365 = vmatpush1.msra.mxu0 %v2348
  %2366 = vmatprep.subr.mxu0 0.0
  %2367 = vmatpush1.msra.mxu0 %v2351
  %2368 = vmatprep.subr.mxu0 0.0
  %2369 = vmatpush1.msra.mxu0 0.0
  %2370 = vmatprep.subr.mxu0 0.0
  %2371 = vmatpush1.msra.mxu0 0.0
  %2372 = vmatprep.subr.mxu0 0.0
  %2373 = vmatpush1.msra.mxu0 0.0
  %2374 = vmatprep.subr.mxu0 0.0
  %2375 = vmatpush1.msra.mxu0 0.0
  %2376 = vmatprep.subr.mxu0 0.0
  %2377 = vmatpush1.msra.mxu0 0.0
  %2378 = vmatprep.subr.mxu0 0.0
  %2379 = vmatpush1.msra.mxu0 0.0
  %2380 = vmatprep.subr.mxu0 0.0
  %2381 = vmatpush1.msra.mxu0 0.0
  %2382 = vmatprep.subr.mxu0 0.0
  %2383 = vmatpush1.msra.mxu0 0.0
  %2384 = vmatprep.subr.mxu0 0.0
  %2385 = vmatpush1.msra.mxu0 0.0
  %2386 = vmatprep.subr.mxu0 0.0
  %2387 = vmatpush1.msra.mxu0 0.0
  %2388 = vmatprep.subr.mxu0 0.0
  %2389 = vmatpush1.msra.mxu0 0.0
  %2390 = vmatprep.subr.mxu0 0.0
  %2391 = vmatpush1.msra.mxu0 0.0
  %2392 = vmatprep.subr.mxu0 0.0
  %2393 = vmatpush1.msra.mxu0 0.0
  %2394 = vmatprep.subr.mxu0 0.0
  %2395 = vmatpush1.msra.mxu0 0.0
  %2396 = vmatprep.subr.mxu0 0.0
  %2397 = vmatpush1.msra.mxu0 0.0
  %2398 = vmatprep.subr.mxu0 0.0
  %2399 = vmatpush1.msra.mxu0 0.0
  %2400 = vmatprep.subr.mxu0 0.0
  %2401 = vmatpush1.msra.mxu0 0.0
  %2402 = vmatprep.subr.mxu0 0.0
  %2403 = vmatpush1.msra.mxu0 0.0
  %2404 = vmatprep.subr.mxu0 0.0
  %2405 = vmatpush1.msra.mxu0 0.0
  %2406 = vmatprep.subr.mxu0 0.0
  %2407 = vmatpush1.msra.mxu0 0.0
  %2408 = vmatprep.subr.mxu0 0.0
  %2409 = vmatpush1.msra.mxu0 0.0
  %2410 = vmatprep.subr.mxu0 0.0
  %2411 = vmatpush1.msra.mxu0 0.0
  %2412 = vmatprep.subr.mxu0 0.0
  %2413 = vmatpush1.msra.mxu0 0.0
  %2414 = vmatprep.subr.mxu0 0.0
  %2415 = vmatpush1.msra.mxu0 0.0
  %2416 = vmatprep.mubr.f32.mxu0 0.0
  %2417 = vmatmul.mubr.f32.gmra.mrb[0].mxu0 %v1291
  %v2418 = vpop.f32.mrb[0].mxu0
  %v2419 = vadd.f32 0.0, %v2418
  %v2420 = vpop.f32.mrb[0].mxu0
  %2421 = vmatprep.mubr.f32.mxu0 0.0
  %2422 = vmatmul.mubr.f32.gmra.mrb[0].mxu0 %v1294
  %v2423 = vpop.f32.mrb[0].mxu0
  %v2424 = vadd.f32 0.0, %v2423
  %v2425 = vpop.f32.mrb[0].mxu0
  %2426 = vmatprep.mubr.f32.mxu0 0.0
  %2427 = vmatmul.mubr.f32.gmra.mrb[0].mxu0 %v1297
  %v2428 = vpop.f32.mrb[0].mxu0
  %v2429 = vadd.f32 0.0, %v2428
  %v2430 = vpop.f32.mrb[0].mxu0
  %2431 = vmatprep.mubr.f32.mxu0 0.0
  %2432 = vmatmul.mubr.f32.gmra.mrb[0].mxu0 %v1300
  %v2433 = vpop.f32.mrb[0].mxu0
  %v2434 = vadd.f32 0.0, %v2433
  %v2435 = vpop.f32.mrb[0].mxu0
  %2436 = vmatprep.mubr.f32.mxu0 0.0
  %2437 = vmatmul.mubr.f32.gmra.mrb[0].mxu0 %v1303
  %v2438 = vpop.f32.mrb[0].mxu0
  %v2439 = vadd.f32 0.0, %v2438
  %v2440 = vpop.f32.mrb[0].mxu0
  %2441 = vmatprep.mubr.f32.mxu0 0.0
  %2442 = vmatmul.mubr.f32.gmra.mrb[0].mxu0 %v1306
  %v2443 = vpop.f32.mrb[0].mxu0
  %v2444 = vadd.f32 0.0, %v2443
  %v2445 = vpop.f32.mrb[0].mxu0
  %2446 = vmatprep.mubr.f32.mxu0 0.0
  %2447 = vmatmul.mubr.f32.gmra.mrb[0].mxu0 %v1309
  %v2448 = vpop.f32.mrb[0].mxu0
  %v2449 = vadd.f32 0.0, %v2448
  %v2450 = vpop.f32.mrb[0].mxu0
  %2451 = vmatprep.mubr.f32.mxu0 0.0
  %2452 = vmatmul.mubr.f32.gmra.mrb[0].mxu0 %v1312
  %v2453 = vpop.f32.mrb[0].mxu0
  %v2454 = vadd.f32 0.0, %v2453
  %v2455 = vpop.f32.mrb[0].mxu0
  %2456 = vdwg.mxu0
  %v2457 = vmul.f32 %v2419, %v1419
  %v2458 = vmul.f32 %v2424, %v1419
  %v2459 = vmul.f32 %v2429, %v1419
  %v2460 = vmul.f32 %v2434, %v1419
  %v2461 = vmul.f32 %v2439, %v1419
  %v2462 = vmul.f32 %v2444, %v1419
  %v2463 = vmul.f32 %v2449, %v1419
  %v2464 = vmul.f32 %v2454, %v1419
  %2466 = vset.pattern.permute.xlu0 0
  %2467 = vperm.xlu0 %2466, %v2457
  %v2468 = vpop.permute.xlu0 %2467
  %2471 = vset.pattern.permute.xlu0 0
  %2472 = vperm.xlu0 %2471, %v2458
  %v2473 = vpop.permute.xlu0 %2472
  %2476 = vset.pattern.permute.xlu0 0
  %2477 = vperm.xlu0 %2476, %v2459
  %v2478 = vpop.permute.xlu0 %2477
  %2481 = vset.pattern.permute.xlu0 0
  %2482 = vperm.xlu0 %2481, %v2460
  %v2483 = vpop.permute.xlu0 %2482
  %2486 = vset.pattern.permute.xlu0 0
  %2487 = vperm.xlu0 %2486, %v2461
  %v2488 = vpop.permute.xlu0 %2487
  %2491 = vset.pattern.permute.xlu0 0
  %2492 = vperm.xlu0 %2491, %v2462
  %v2493 = vpop.permute.xlu0 %2492
  %2496 = vset.pattern.permute.xlu0 0
  %2497 = vperm.xlu0 %2496, %v2463
  %v2498 = vpop.permute.xlu0 %2497
  %2501 = vset.pattern.permute.xlu0 0
  %2502 = vperm.xlu0 %2501, %v2464
  %v2503 = vpop.permute.xlu0 %2502
  %v2505 = vsub.f32 %v2282, %v2468
  %v2506 = vsub.f32 %v2284, %v2468
  %v2507 = vsub.f32 %v2288, %v2473
  %v2508 = vsub.f32 %v2290, %v2473
  %v2509 = vsub.f32 %v2294, %v2478
  %v2510 = vsub.f32 %v2296, %v2478
  %v2511 = vsub.f32 %v2300, %v2483
  %v2512 = vsub.f32 %v2302, %v2483
  %v2513 = vsub.f32 %v2306, %v2488
  %v2514 = vsub.f32 %v2308, %v2488
  %v2515 = vsub.f32 %v2312, %v2493
  %v2516 = vsub.f32 %v2314, %v2493
  %v2517 = vsub.f32 %v2318, %v2498
  %v2518 = vsub.f32 %v2320, %v2498
  %v2519 = vsub.f32 %v2324, %v2503
  %v2520 = vsub.f32 %v2326, %v2503
  %v2521 = vmul.f32 %v2505, %v2505
  %v2522 = vmul.f32 %v2506, %v2506
  %v2523 = vmul.f32 %v2507, %v2507
  %v2524 = vmul.f32 %v2508, %v2508
  %v2525 = vmul.f32 %v2509, %v2509
  %v2526 = vmul.f32 %v2510, %v2510
  %v2527 = vmul.f32 %v2511, %v2511
  %v2528 = vmul.f32 %v2512, %v2512
  %v2529 = vmul.f32 %v2513, %v2513
  %v2530 = vmul.f32 %v2514, %v2514
  %v2531 = vmul.f32 %v2515, %v2515
  %v2532 = vmul.f32 %v2516, %v2516
  %v2533 = vmul.f32 %v2517, %v2517
  %v2534 = vmul.f32 %v2518, %v2518
  %v2535 = vmul.f32 %v2519, %v2519
  %v2536 = vmul.f32 %v2520, %v2520
  %v2537 = vadd.f32 %v2521, %v2522
  %2538 = vadd.xlane.f32.xlu0 %v2537
  %v2539 = vpop.xlane.xlu0 %2538
  %v2540 = vadd.f32 %v2523, %v2524
  %2541 = vadd.xlane.f32.xlu0 %v2540
  %v2542 = vpop.xlane.xlu0 %2541
  %v2543 = vadd.f32 %v2525, %v2526
  %2544 = vadd.xlane.f32.xlu0 %v2543
  %v2545 = vpop.xlane.xlu0 %2544
  %v2546 = vadd.f32 %v2527, %v2528
  %2547 = vadd.xlane.f32.xlu0 %v2546
  %v2548 = vpop.xlane.xlu0 %2547
  %v2549 = vadd.f32 %v2529, %v2530
  %2550 = vadd.xlane.f32.xlu0 %v2549
  %v2551 = vpop.xlane.xlu0 %2550
  %v2552 = vadd.f32 %v2531, %v2532
  %2553 = vadd.xlane.f32.xlu0 %v2552
  %v2554 = vpop.xlane.xlu0 %2553
  %v2555 = vadd.f32 %v2533, %v2534
  %2556 = vadd.xlane.f32.xlu0 %v2555
  %v2557 = vpop.xlane.xlu0 %2556
  %v2558 = vadd.f32 %v2535, %v2536
  %2559 = vadd.xlane.f32.xlu0 %v2558
  %v2560 = vpop.xlane.xlu0 %2559
  %2561 = vmatprep.subr.mxu0 0.0
  %2562 = vmatpush1.msra.mxu0 %v2539
  %2563 = vmatprep.subr.mxu0 0.0
  %2564 = vmatpush1.msra.mxu0 %v2542
  %2565 = vmatprep.subr.mxu0 0.0
  %2566 = vmatpush1.msra.mxu0 %v2545
  %2567 = vmatprep.subr.mxu0 0.0
  %2568 = vmatpush1.msra.mxu0 %v2548
  %2569 = vmatprep.subr.mxu0 0.0
  %2570 = vmatpush1.msra.mxu0 %v2551
  %2571 = vmatprep.subr.mxu0 0.0
  %2572 = vmatpush1.msra.mxu0 %v2554
  %2573 = vmatprep.subr.mxu0 0.0
  %2574 = vmatpush1.msra.mxu0 %v2557
  %2575 = vmatprep.subr.mxu0 0.0
  %2576 = vmatpush1.msra.mxu0 %v2560
  %2577 = vmatprep.subr.mxu0 0.0
  %2578 = vmatpush1.msra.mxu0 0.0
  %2579 = vmatprep.subr.mxu0 0.0
  %2580 = vmatpush1.msra.mxu0 0.0
  %2581 = vmatprep.subr.mxu0 0.0
  %2582 = vmatpush1.msra.mxu0 0.0
  %2583 = vmatprep.subr.mxu0 0.0
  %2584 = vmatpush1.msra.mxu0 0.0
  %2585 = vmatprep.subr.mxu0 0.0
  %2586 = vmatpush1.msra.mxu0 0.0
  %2587 = vmatprep.subr.mxu0 0.0
  %2588 = vmatpush1.msra.mxu0 0.0
  %2589 = vmatprep.subr.mxu0 0.0
  %2590 = vmatpush1.msra.mxu0 0.0
  %2591 = vmatprep.subr.mxu0 0.0
  %2592 = vmatpush1.msra.mxu0 0.0
  %2593 = vmatprep.subr.mxu0 0.0
  %2594 = vmatpush1.msra.mxu0 0.0
  %2595 = vmatprep.subr.mxu0 0.0
  %2596 = vmatpush1.msra.mxu0 0.0
  %2597 = vmatprep.subr.mxu0 0.0
  %2598 = vmatpush1.msra.mxu0 0.0
  %2599 = vmatprep.subr.mxu0 0.0
  %2600 = vmatpush1.msra.mxu0 0.0
  %2601 = vmatprep.subr.mxu0 0.0
  %2602 = vmatpush1.msra.mxu0 0.0
  %2603 = vmatprep.subr.mxu0 0.0
  %2604 = vmatpush1.msra.mxu0 0.0
  %2605 = vmatprep.subr.mxu0 0.0
  %2606 = vmatpush1.msra.mxu0 0.0
  %2607 = vmatprep.subr.mxu0 0.0
  %2608 = vmatpush1.msra.mxu0 0.0
  %2609 = vmatprep.subr.mxu0 0.0
  %2610 = vmatpush1.msra.mxu0 0.0
  %2611 = vmatprep.subr.mxu0 0.0
  %2612 = vmatpush1.msra.mxu0 0.0
  %2613 = vmatprep.subr.mxu0 0.0
  %2614 = vmatpush1.msra.mxu0 0.0
  %2615 = vmatprep.subr.mxu0 0.0
  %2616 = vmatpush1.msra.mxu0 0.0
  %2617 = vmatprep.subr.mxu0 0.0
  %2618 = vmatpush1.msra.mxu0 0.0
  %2619 = vmatprep.subr.mxu0 0.0
  %2620 = vmatpush1.msra.mxu0 0.0
  %2621 = vmatprep.subr.mxu0 0.0
  %2622 = vmatpush1.msra.mxu0 0.0
  %2623 = vmatprep.subr.mxu0 0.0
  %2624 = vmatpush1.msra.mxu0 0.0
  %2625 = vmatprep.mubr.f32.mxu0 0.0
  %2626 = vmatmul.mubr.f32.gmra.mrb[0].mxu0 %v1291
  %v2627 = vpop.f32.mrb[0].mxu0
  %v2628 = vadd.f32 0.0, %v2627
  %v2629 = vpop.f32.mrb[0].mxu0
  %2630 = vmatprep.mubr.f32.mxu0 0.0
  %2631 = vmatmul.mubr.f32.gmra.mrb[0].mxu0 %v1294
  %v2632 = vpop.f32.mrb[0].mxu0
  %v2633 = vadd.f32 0.0, %v2632
  %v2634 = vpop.f32.mrb[0].mxu0
  %2635 = vmatprep.mubr.f32.mxu0 0.0
  %2636 = vmatmul.mubr.f32.gmra.mrb[0].mxu0 %v1297
  %v2637 = vpop.f32.mrb[0].mxu0
  %v2638 = vadd.f32 0.0, %v2637
  %v2639 = vpop.f32.mrb[0].mxu0
  %2640 = vmatprep.mubr.f32.mxu0 0.0
  %2641 = vmatmul.mubr.f32.gmra.mrb[0].mxu0 %v1300
  %v2642 = vpop.f32.mrb[0].mxu0
  %v2643 = vadd.f32 0.0, %v2642
  %v2644 = vpop.f32.mrb[0].mxu0
  %2645 = vmatprep.mubr.f32.mxu0 0.0
  %2646 = vmatmul.mubr.f32.gmra.mrb[0].mxu0 %v1303
  %v2647 = vpop.f32.mrb[0].mxu0
  %v2648 = vadd.f32 0.0, %v2647
  %v2649 = vpop.f32.mrb[0].mxu0
  %2650 = vmatprep.mubr.f32.mxu0 0.0
  %2651 = vmatmul.mubr.f32.gmra.mrb[0].mxu0 %v1306
  %v2652 = vpop.f32.mrb[0].mxu0
  %v2653 = vadd.f32 0.0, %v2652
  %v2654 = vpop.f32.mrb[0].mxu0
  %2655 = vmatprep.mubr.f32.mxu0 0.0
  %2656 = vmatmul.mubr.f32.gmra.mrb[0].mxu0 %v1309
  %v2657 = vpop.f32.mrb[0].mxu0
  %v2658 = vadd.f32 0.0, %v2657
  %v2659 = vpop.f32.mrb[0].mxu0
  %2660 = vmatprep.mubr.f32.mxu0 0.0
  %2661 = vmatmul.mubr.f32.gmra.mrb[0].mxu0 %v1312
  %v2662 = vpop.f32.mrb[0].mxu0
  %v2663 = vadd.f32 0.0, %v2662
  %v2664 = vpop.f32.mrb[0].mxu0
  %2665 = vdwg.mxu0
  %v2666 = vmul.f32 %v2628, %v1419
  %v2667 = vmul.f32 %v2633, %v1419
  %v2668 = vmul.f32 %v2638, %v1419
  %v2669 = vmul.f32 %v2643, %v1419
  %v2670 = vmul.f32 %v2648, %v1419
  %v2671 = vmul.f32 %v2653, %v1419
  %v2672 = vmul.f32 %v2658, %v1419
  %v2673 = vmul.f32 %v2663, %v1419
  %v2674 = vadd.f32 %v2666, 1e-05
  %v2675 = vadd.f32 %v2667, 1e-05
  %v2676 = vadd.f32 %v2668, 1e-05
  %v2677 = vadd.f32 %v2669, 1e-05
  %v2678 = vadd.f32 %v2670, 1e-05
  %v2679 = vadd.f32 %v2671, 1e-05
  %v2680 = vadd.f32 %v2672, 1e-05
  %v2681 = vadd.f32 %v2673, 1e-05
  %v2682 = vrsqrt.pop %v2674
  %v2683 = vrsqrt.pop %v2675
  %v2684 = vrsqrt.pop %v2676
  %v2685 = vrsqrt.pop %v2677
  %v2686 = vrsqrt.pop %v2678
  %v2687 = vrsqrt.pop %v2679
  %v2688 = vrsqrt.pop %v2680
  %v2689 = vrsqrt.pop %v2681
  %2691 = vset.pattern.permute.xlu0 0
  %2692 = vperm.xlu0 %2691, %v2682
  %v2693 = vpop.permute.xlu0 %2692
  %2696 = vset.pattern.permute.xlu0 0
  %2697 = vperm.xlu0 %2696, %v2683
  %v2698 = vpop.permute.xlu0 %2697
  %2701 = vset.pattern.permute.xlu0 0
  %2702 = vperm.xlu0 %2701, %v2684
  %v2703 = vpop.permute.xlu0 %2702
  %2706 = vset.pattern.permute.xlu0 0
  %2707 = vperm.xlu0 %2706, %v2685
  %v2708 = vpop.permute.xlu0 %2707
  %2711 = vset.pattern.permute.xlu0 0
  %2712 = vperm.xlu0 %2711, %v2686
  %v2713 = vpop.permute.xlu0 %2712
  %2716 = vset.pattern.permute.xlu0 0
  %2717 = vperm.xlu0 %2716, %v2687
  %v2718 = vpop.permute.xlu0 %2717
  %2721 = vset.pattern.permute.xlu0 0
  %2722 = vperm.xlu0 %2721, %v2688
  %v2723 = vpop.permute.xlu0 %2722
  %2726 = vset.pattern.permute.xlu0 0
  %2727 = vperm.xlu0 %2726, %v2689
  %v2728 = vpop.permute.xlu0 %2727
  %v2730 = vmul.f32 %v2505, %v2693
  %v2731 = vmul.f32 %v2506, %v2693
  %v2732 = vmul.f32 %v2507, %v2698
  %v2733 = vmul.f32 %v2508, %v2698
  %v2734 = vmul.f32 %v2509, %v2703
  %v2735 = vmul.f32 %v2510, %v2703
  %v2736 = vmul.f32 %v2511, %v2708
  %v2737 = vmul.f32 %v2512, %v2708
  %v2738 = vmul.f32 %v2513, %v2713
  %v2739 = vmul.f32 %v2514, %v2713
  %v2740 = vmul.f32 %v2515, %v2718
  %v2741 = vmul.f32 %v2516, %v2718
  %v2742 = vmul.f32 %v2517, %v2723
  %v2743 = vmul.f32 %v2518, %v2723
  %v2744 = vmul.f32 %v2519, %v2728
  %v2745 = vmul.f32 %v2520, %v2728
  %v2746 = vmul.f32 %v2730, %v1712
  %v2747 = vmul.f32 %v2731, %v1712
  %v2748 = vmul.f32 %v2732, %v1717
  %v2749 = vmul.f32 %v2733, %v1717
  %v2750 = vmul.f32 %v2734, %v1722
  %v2751 = vmul.f32 %v2735, %v1722
  %v2752 = vmul.f32 %v2736, %v1727
  %v2753 = vmul.f32 %v2737, %v1727
  %v2754 = vmul.f32 %v2738, %v1732
  %v2755 = vmul.f32 %v2739, %v1732
  %v2756 = vmul.f32 %v2740, %v1737
  %v2757 = vmul.f32 %v2741, %v1737
  %v2758 = vmul.f32 %v2742, %v1742
  %v2759 = vmul.f32 %v2743, %v1742
  %v2760 = vmul.f32 %v2744, %v1747
  %v2761 = vmul.f32 %v2745, %v1747
  %v2762 = vadd.f32 %v2746, %v1768
  %v2763 = vadd.f32 %v2747, %v1768
  %v2764 = vadd.f32 %v2748, %v1773
  %v2765 = vadd.f32 %v2749, %v1773
  %v2766 = vadd.f32 %v2750, %v1778
  %v2767 = vadd.f32 %v2751, %v1778
  %v2768 = vadd.f32 %v2752, %v1783
  %v2769 = vadd.f32 %v2753, %v1783
  %v2770 = vadd.f32 %v2754, %v1788
  %v2771 = vadd.f32 %v2755, %v1788
  %v2772 = vadd.f32 %v2756, %v1793
  %v2773 = vadd.f32 %v2757, %v1793
  %v2774 = vadd.f32 %v2758, %v1798
  %v2775 = vadd.f32 %v2759, %v1798
  %v2776 = vadd.f32 %v2760, %v1803
  %v2777 = vadd.f32 %v2761, %v1803
  %s2778 = scalar_lea.vmem %s20, 128
  %2779 = vst [vmem:[%s2778] sm:$0xff] %v2762
  %2780 = vst [vmem:[%s2778 + $0x8] sm:$0xff] %v2763
  %2781 = vst [vmem:[%s2778 + $0x10] sm:$0xff] %v2764
  %2782 = vst [vmem:[%s2778 + $0x18] sm:$0xff] %v2765
  %2783 = vst [vmem:[%s2778 + $0x20] sm:$0xff] %v2766
  %2784 = vst [vmem:[%s2778 + $0x28] sm:$0xff] %v2767
  %2785 = vst [vmem:[%s2778 + $0x30] sm:$0xff] %v2768
  %2786 = vst [vmem:[%s2778 + $0x38] sm:$0xff] %v2769
  %2787 = vst [vmem:[%s2778 + $0x40] sm:$0xff] %v2770
  %2788 = vst [vmem:[%s2778 + $0x48] sm:$0xff] %v2771
  %2789 = vst [vmem:[%s2778 + $0x50] sm:$0xff] %v2772
  %2790 = vst [vmem:[%s2778 + $0x58] sm:$0xff] %v2773
  %2791 = vst [vmem:[%s2778 + $0x60] sm:$0xff] %v2774
  %2792 = vst [vmem:[%s2778 + $0x68] sm:$0xff] %v2775
  %2793 = vst [vmem:[%s2778 + $0x70] sm:$0xff] %v2776
  %2794 = vst [vmem:[%s2778 + $0x78] sm:$0xff] %v2777
  // Predicated region
  $region74: #{forward.1} parent=0 // pred_check
    _
  $region75: #{forward.1} parent=0 // pred_check_branch
    %2796 = sbr.rel (0) target = $region77
  $region76: #{forward.1} parent=0 // pred_region
    _
  $region77: #{forward.1} parent=0 // pred_fallthru
    _
  // Predicated region
  $region78: #{forward.1} parent=0 // pred_check
    _
  $region79: #{forward.1} parent=0 // pred_check_branch
    %2798 = sbr.rel (0) target = $region81
  $region80: #{forward.1} parent=0 // pred_region
    _
  $region81: #{forward.1} parent=0 // pred_fallthru
    _
  // Predicated region
  $region82: #{forward.1} parent=0 // pred_check
    _
  $region83: #{forward.1} parent=0 // pred_check_branch
    %2800 = sbr.rel (0) target = $region85
  $region84: #{forward.1} parent=0 // pred_region
    _
  $region85: #{forward.1} parent=0 // pred_fallthru
    _
  // Predicated region
  $region86: #{forward.1} parent=0 // pred_check
    _
  $region87: #{forward.1} parent=0 // pred_check_branch
    %2802 = sbr.rel (0) target = $region89
  $region88: #{forward.1} parent=0 // pred_region
    _
  $region89: #{forward.1} parent=0 // pred_fallthru
    _
  // Predicated region
  $region90: #{forward.1} parent=0 // pred_check
    _
  $region91: #{forward.1} parent=0 // pred_check_branch
    %2804 = sbr.rel (0) target = $region93
  $region92: #{forward.1} parent=0 // pred_region
    _
  $region93: #{forward.1} parent=0 // pred_fallthru
    _
  // Predicated region
  $region94: #{forward.1} parent=0 // pred_check
    _
  $region95: #{forward.1} parent=0 // pred_check_branch
    %2806 = sbr.rel (0) target = $region97
  $region96: #{forward.1} parent=0 // pred_region
    _
  $region97: #{forward.1} parent=0 // pred_fallthru
    _

</llo_original>
